<compile_context>
chip_gen: v5e
topology: v5e:2x2
jax: 0.10.0
libtpu: 0.0.40
codegen_flags: <defaults>
</compile_context>

<pallas_src>
import math

import jax
import jax.numpy as jnp
from jax.experimental import pallas as pl
from jax.experimental.pallas import tpu as pltpu

_EPS = 1e-5
_LEAKY_SLOPE = 0.01  # torch nn.LeakyReLU default


def _round_up(n, m):
    return ((n + m - 1) // m) * m


def _pad_to(a, shape):
    pads = [(0, t - s) for s, t in zip(a.shape, shape)]
    if any(p for _, p in pads):
        a = jnp.pad(a, pads)
    return a


# ---------------------------------------------------------------------------
# Kernel.  One batch tile per grid step.
#   x_ref  (few, TB, D0p) bf16      w*_ref (Din_p, Dout_p) bf16   (resident)
#   b*_ref (1, Dout_p)    f32       s*/t*  (few,) f32 in SMEM
#   c3_ref (1, OUTp)      f32       o_ref  (TB, OUTp)
# Per f (static Python unroll, few is small):
#   h = leaky((x_f @ W1 + b1) * s1_f + t1_f)
#   h = leaky((h   @ W2 + b2) * s2_f + t2_f)
#   g += h * (s3_f / few)
# out = g @ W3 + (mean(s3)*b3 + mean(t3))     <- exact fusion of mean over few
# ---------------------------------------------------------------------------
def _make_rml_kernel(few):
    def kernel(x_ref, w1_ref, b1_ref, s1_ref, t1_ref,
               w2_ref, b2_ref, s2_ref, t2_ref,
               s3_ref, w3_ref, c3_ref, o_ref):
        g = None
        for f in range(few):
            # layer 1
            h = jnp.dot(x_ref[f], w1_ref[...],
                        preferred_element_type=jnp.float32)
            h = (h + b1_ref[...]) * s1_ref[f] + t1_ref[f]
            h = jnp.where(h >= 0, h, _LEAKY_SLOPE * h)
            # layer 2
            h = jnp.dot(h.astype(jnp.bfloat16), w2_ref[...],
                        preferred_element_type=jnp.float32)
            h = (h + b2_ref[...]) * s2_ref[f] + t2_ref[f]
            h = jnp.where(h >= 0, h, _LEAKY_SLOPE * h)
            # fused mean-over-few accumulation (s3 already divided by `few`)
            h = h * s3_ref[f]
            g = h if g is None else g + h
        # layer 3 (single small matmul on the reduced tile)
        o = jnp.dot(g.astype(jnp.bfloat16), w3_ref[...],
                    preferred_element_type=jnp.float32)
        o_ref[...] = (o + c3_ref[...]).astype(o_ref.dtype)
    return kernel


# ---------------------------------------------------------------------------
# One-time parameter preparation (feedback: hoist out of the per-call path).
# ---------------------------------------------------------------------------
def prepare_params(params, few, eps=_EPS):
    F = int(few)
    D0, H1 = (int(d) for d in params['w1'].shape)
    H2 = int(params['w2'].shape[1])
    OUT = int(params['w3'].shape[1])
    D0p, H1p, H2p, OUTp = (_round_up(d, 128) for d in (D0, H1, H2, OUT))

    def bn_fold(bn):
        gamma, beta, rmean, rvar = (jnp.asarray(a, jnp.float32) for a in bn)
        s = gamma / jnp.sqrt(rvar + eps)
        t = beta - rmean * s
        return s, t

    s1, t1 = bn_fold(params['bn1'])
    s2, t2 = bn_fold(params['bn2'])
    s3, t3 = bn_fold(params['bn3'])

    def pad_w(w, dinp, doutp):
        return _pad_to(jnp.asarray(w, jnp.float32), (dinp, doutp)).astype(jnp.bfloat16)

    def pad_b(b, doutp):
        return _pad_to(jnp.asarray(b, jnp.float32), (doutp,)).reshape(1, doutp)

    # mean over few fused:  mean_f(s3_f*(hW3+b3)+t3_f)
    #   = (sum_f (s3_f/F) h_f) W3 + mean(s3)*b3 + mean(t3)
    c3 = (jnp.mean(s3) * pad_b(params['b3'], OUTp) + jnp.mean(t3)).astype(jnp.float32)

    return dict(
        few=F,
        dims=(D0, H1, H2, OUT),
        pdims=(D0p, H1p, H2p, OUTp),
        w1=pad_w(params['w1'], D0p, H1p), b1=pad_b(params['b1'], H1p),
        s1=s1, t1=t1,
        w2=pad_w(params['w2'], H1p, H2p), b2=pad_b(params['b2'], H2p),
        s2=s2, t2=t2,
        s3=(s3 / F),
        w3=pad_w(params['w3'], H2p, OUTp), c3=c3,
    )


# ---------------------------------------------------------------------------
# Forward wrapper.
# ---------------------------------------------------------------------------
def relation_meta_learner_forward(inputs, params=None, *, prepared=None,
                                  batch_tile=None, out_dtype=jnp.float32):
    """inputs: (B, few, 2, embed_size) f32.  Returns (B, 1, 1, out_size)."""
    B, F = int(inputs.shape[0]), int(inputs.shape[1])
    if prepared is None:
        prepared = prepare_params(params, F)
    assert prepared['few'] == F, "params were prepared for a different `few`"
    D0, H1, H2, OUT = prepared['dims']
    D0p, H1p, H2p, OUTp = prepared['pdims']

    x = inputs.reshape(B, F, -1).astype(jnp.float32)
    assert x.shape[-1] == D0, (x.shape, D0)

    # Batch tile: target ~512-row matmuls (fills the 256-wide MXU on v6e/v7x,
    # generous for v5e's 128-wide MXU), but keep >=2 batch tiles when B allows
    # so the "parallel" grid axis can be sharded across v7x's two TensorCores.
    if batch_tile is None:
        n_tiles = max(1, -(-B // 512))
        tb = _round_up(-(-B // n_tiles), 8)
        if B > 8 and -(-B // tb) < 2:
            tb = _round_up(-(-B // 2), 8)
        batch_tile = tb
    TB = int(batch_tile)
    assert TB % 8 == 0, "batch_tile must be a multiple of 8"
    Bp = _round_up(B, TB)
    nb = Bp // TB

    # Activations: zero-pad (exact: padded weight rows/cols are zero), put
    # `few` outermost, cast to bf16.  XLA fuses pad+transpose+cast into one
    # copy; each per-f slab the kernel reads is then a contiguous (TB, D0p)
    # tile-aligned block.
    xp = _pad_to(x, (Bp, F, D0p))
    xp = jnp.transpose(xp, (1, 0, 2)).astype(jnp.bfloat16)        # (F, Bp, D0p)

    const2d = lambda i: (0, 0)      # weights / bias rows stay VMEM-resident
    smem = pl.BlockSpec(memory_space=pltpu.MemorySpace.SMEM)      # (few,) scalars

    out = pl.pallas_call(
        _make_rml_kernel(F),
        out_shape=jax.ShapeDtypeStruct((Bp, OUTp), out_dtype),
        grid=(nb,),
        in_specs=[
            pl.BlockSpec((F, TB, D0p), lambda i: (0, i, 0)),      # activations
            pl.BlockSpec((D0p, H1p), const2d),                    # w1
            pl.BlockSpec((1, H1p), const2d),                      # b1
            smem, smem,                                           # s1, t1
            pl.BlockSpec((H1p, H2p), const2d),                    # w2
            pl.BlockSpec((1, H2p), const2d),                      # b2
            smem, smem,                                           # s2, t2
            smem,                                                 # s3 / few
            pl.BlockSpec((H2p, OUTp), const2d),                   # w3
            pl.BlockSpec((1, OUTp), const2d),                     # c3
        ],
        out_specs=pl.BlockSpec((TB, OUTp), lambda i: (i, 0)),
        compiler_params=pltpu.CompilerParams(
            dimension_semantics=("parallel",),
            vmem_limit_bytes=32 * 1024 * 1024),
    )(xp,
      prepared['w1'], prepared['b1'], prepared['s1'], prepared['t1'],
      prepared['w2'], prepared['b2'], prepared['s2'], prepared['t2'],
      prepared['s3'], prepared['w3'], prepared['c3'])

    return out[:B, :OUT].reshape(B, 1, 1, OUT)


# ---------------------------------------------------------------------------
# Deterministic torch-style parameter construction (weights stored (in, out)).
# ---------------------------------------------------------------------------
def make_params(key, few, embed_size, num_hidden1, num_hidden2, out_size):
    def xavier_normal(k, fan_in, fan_out):
        std = math.sqrt(2.0 / (fan_in + fan_out))
        return std * jax.random.normal(k, (fan_in, fan_out), jnp.float32)

    def linear_bias(k, fan_in, fan_out):
        bound = 1.0 / math.sqrt(fan_in)
        return jax.random.uniform(k, (fan_out,), jnp.float32, -bound, bound)

    def bn_params(k, few_):
        # non-trivial affine / running stats so the folded BN math is exercised
        k1, k2, k3, k4 = jax.random.split(k, 4)
        gamma = jax.random.uniform(k1, (few_,), jnp.float32, 0.5, 1.5)
        beta = 0.1 * jax.random.normal(k2, (few_,), jnp.float32)
        rmean = 0.1 * jax.random.normal(k3, (few_,), jnp.float32)
        rvar = jax.random.uniform(k4, (few_,), jnp.float32, 0.5, 1.5)
        return (gamma, beta, rmean, rvar)

    ks = jax.random.split(key, 9)
    return {
        'w1': xavier_normal(ks[0], 2 * embed_size, num_hidden1),
        'b1': linear_bias(ks[1], 2 * embed_size, num_hidden1),
        'bn1': bn_params(ks[2], few),
        'w2': xavier_normal(ks[3], num_hidden1, num_hidden2),
        'b2': linear_bias(ks[4], num_hidden1, num_hidden2),
        'bn2': bn_params(ks[5], few),
        'w3': xavier_normal(ks[6], num_hidden2, out_size),
        'b3': linear_bias(ks[7], num_hidden2, out_size),
        'bn3': bn_params(ks[8], few),
    }


def reference_forward(inputs, params, eps=_EPS):
    """Pure-JAX f32 reference of the torch eval-mode forward."""
    B, F = inputs.shape[0], inputs.shape[1]
    x = inputs.reshape(B, F, -1).astype(jnp.float32)

    def bn(y, bnp):
        gamma, beta, rmean, rvar = bnp
        s = (gamma / jnp.sqrt(rvar + eps)).reshape(1, F, 1)
        t = (beta.reshape(1, F, 1) - rmean.reshape(1, F, 1) * s)
        return y * s + t

    def layer(h, w, b, bnp, leaky):
        y = jnp.einsum('bfd,dh->bfh', h, w) + b[None, None, :]
        y = bn(y, bnp)
        if leaky:
            y = jnp.where(y >= 0, y, _LEAKY_SLOPE * y)
        return y

    h = layer(x, params['w1'], params['b1'], params['bn1'], True)
    h = layer(h, params['w2'], params['b2'], params['bn2'], True)
    h = layer(h, params['w3'], params['b3'], params['bn3'], False)
    return jnp.mean(h, axis=1).reshape(B, 1, 1, -1)


if __name__ == "__main__":
    # Small shapes consistent with the module; deliberately not multiples of
    # 128 so the lane-padding path is exercised.  With B=16 the default
    # batch_tile heuristic picks TB=8 -> a 2-step grid, so the pipeline over
    # batch tiles is exercised as well.
    B, FEW, E = 16, 4, 50          # 2*E = 100 -> padded to 128 lanes
    H1, H2, OUT = 160, 96, 80      # padded to 256 / 128 / 128 lanes

    key = jax.random.PRNGKey(0)
    k_x, k_p = jax.random.split(key)
    inputs = jax.random.normal(k_x, (B, FEW, 2, E), jnp.float32)
    params = make_params(k_p, FEW, E, H1, H2, OUT)

    prepared = prepare_params(params, FEW)          # one-time parameter prep
    out = relation_meta_learner_forward(inputs, prepared=prepared)
    out = jax.block_until_ready(out)

    ref = reference_forward(inputs, params)
    assert out.shape == (B, 1, 1, OUT), out.shape
    # bf16 matmul operands vs f32 reference -> loosened tolerance
    assert jnp.allclose(out, ref, atol=5e-2, rtol=5e-2), \
        float(jnp.max(jnp.abs(out - ref)))

    print("KERNEL_OK")
</pallas_src>

<mosaic_0001>
module attributes {stable_mosaic.version = 11 : i64} {
  func.func @kernel(%arg0: i32, %arg1: memref<4x8x128xbf16, #tpu.memory_space<vmem>>, %arg2: memref<128x256xbf16, #tpu.memory_space<vmem>>, %arg3: memref<1x256xf32, #tpu.memory_space<vmem>>, %arg4: memref<4xf32, #tpu.memory_space<smem>>, %arg5: memref<4xf32, #tpu.memory_space<smem>>, %arg6: memref<256x128xbf16, #tpu.memory_space<vmem>>, %arg7: memref<1x128xf32, #tpu.memory_space<vmem>>, %arg8: memref<4xf32, #tpu.memory_space<smem>>, %arg9: memref<4xf32, #tpu.memory_space<smem>>, %arg10: memref<4xf32, #tpu.memory_space<smem>>, %arg11: memref<128x128xbf16, #tpu.memory_space<vmem>>, %arg12: memref<1x128xf32, #tpu.memory_space<vmem>>, %arg13: memref<8x128xf32, #tpu.memory_space<vmem>>) attributes {dimension_semantics = [#tpu.dimension_semantics<parallel>], iteration_bounds = array<i64: 2>, scalar_prefetch = 0 : i64, scratch_operands = 0 : i64, tpu.core_type = #tpu.core_type<tc>, window_params = [{transform_indices = @transform_0, window_bounds = array<i64: 4, 8, 128>}, {pipeline_mode = #tpu.pipeline_mode<synchronous>, transform_indices = @transform_1, window_bounds = array<i64: 128, 256>}, {pipeline_mode = #tpu.pipeline_mode<synchronous>, transform_indices = @transform_2, window_bounds = array<i64: 1, 256>}, {transform_indices = @transform_3, window_bounds = array<i64: 4>}, {transform_indices = @transform_4, window_bounds = array<i64: 4>}, {pipeline_mode = #tpu.pipeline_mode<synchronous>, transform_indices = @transform_5, window_bounds = array<i64: 256, 128>}, {pipeline_mode = #tpu.pipeline_mode<synchronous>, transform_indices = @transform_6, window_bounds = array<i64: 1, 128>}, {transform_indices = @transform_7, window_bounds = array<i64: 4>}, {transform_indices = @transform_8, window_bounds = array<i64: 4>}, {transform_indices = @transform_9, window_bounds = array<i64: 4>}, {pipeline_mode = #tpu.pipeline_mode<synchronous>, transform_indices = @transform_10, window_bounds = array<i64: 128, 128>}, {pipeline_mode = #tpu.pipeline_mode<synchronous>, transform_indices = @transform_11, window_bounds = array<i64: 1, 128>}, {transform_indices = @transform_12, window_bounds = array<i64: 8, 128>}]} {
    %c0 = arith.constant 0 : index
    %c0_0 = arith.constant 0 : index
    %c0_1 = arith.constant 0 : index
    %0 = vector.load %arg1[%c0, %c0_0, %c0_1] : memref<4x8x128xbf16, #tpu.memory_space<vmem>>, vector<1x8x128xbf16>
    %1 = vector.shape_cast %0 : vector<1x8x128xbf16> to vector<8x128xbf16>
    %c0_2 = arith.constant 0 : index
    %c0_3 = arith.constant 0 : index
    %2 = vector.load %arg2[%c0_2, %c0_3] : memref<128x256xbf16, #tpu.memory_space<vmem>>, vector<128x256xbf16>
    %cst = arith.constant dense<0.000000e+00> : vector<8x256xf32>
    %3 = tpu.matmul %1, %2, %cst {dimension_numbers = #tpu.dot_dimension_numbers<[1], [0], [0], [1], [0, 0, 1, 1], [], []>} : vector<8x128xbf16>, vector<128x256xbf16>, vector<8x256xf32> -> vector<8x256xf32>
    %c0_4 = arith.constant 0 : index
    %c0_5 = arith.constant 0 : index
    %4 = vector.load %arg3[%c0_4, %c0_5] : memref<1x256xf32, #tpu.memory_space<vmem>>, vector<1x256xf32>
    %5 = vector.broadcast %4 : vector<1x256xf32> to vector<8x256xf32>
    %6 = arith.addf %3, %5 : vector<8x256xf32>
    %c0_6 = arith.constant 0 : index
    %7 = memref.load %arg4[%c0_6] : memref<4xf32, #tpu.memory_space<smem>>
    %8 = vector.broadcast %7 : f32 to vector<8x256xf32>
    %9 = arith.mulf %6, %8 : vector<8x256xf32>
    %c0_7 = arith.constant 0 : index
    %10 = memref.load %arg5[%c0_7] : memref<4xf32, #tpu.memory_space<smem>>
    %11 = vector.broadcast %10 : f32 to vector<8x256xf32>
    %12 = arith.addf %9, %11 : vector<8x256xf32>
    %cst_8 = arith.constant 0.000000e+00 : f32
    %13 = vector.broadcast %cst_8 : f32 to vector<8x256xf32>
    %14 = arith.cmpf oge, %12, %13 : vector<8x256xf32>
    %cst_9 = arith.constant 0.00999999977 : f32
    %15 = vector.broadcast %cst_9 : f32 to vector<8x256xf32>
    %16 = arith.mulf %15, %12 : vector<8x256xf32>
    %17 = arith.select %14, %12, %16 : vector<8x256xi1>, vector<8x256xf32>
    %18 = arith.truncf %17 : vector<8x256xf32> to vector<8x256xbf16>
    %c0_10 = arith.constant 0 : index
    %c0_11 = arith.constant 0 : index
    %19 = vector.load %arg6[%c0_10, %c0_11] : memref<256x128xbf16, #tpu.memory_space<vmem>>, vector<256x128xbf16>
    %cst_12 = arith.constant dense<0.000000e+00> : vector<8x128xf32>
    %20 = tpu.matmul %18, %19, %cst_12 {dimension_numbers = #tpu.dot_dimension_numbers<[1], [0], [0], [1], [0, 0, 1, 1], [], []>} : vector<8x256xbf16>, vector<256x128xbf16>, vector<8x128xf32> -> vector<8x128xf32>
    %c0_13 = arith.constant 0 : index
    %c0_14 = arith.constant 0 : index
    %21 = vector.load %arg7[%c0_13, %c0_14] : memref<1x128xf32, #tpu.memory_space<vmem>>, vector<1x128xf32>
    %22 = vector.broadcast %21 : vector<1x128xf32> to vector<8x128xf32>
    %23 = arith.addf %20, %22 : vector<8x128xf32>
    %c0_15 = arith.constant 0 : index
    %24 = memref.load %arg8[%c0_15] : memref<4xf32, #tpu.memory_space<smem>>
    %25 = vector.broadcast %24 : f32 to vector<8x128xf32>
    %26 = arith.mulf %23, %25 : vector<8x128xf32>
    %c0_16 = arith.constant 0 : index
    %27 = memref.load %arg9[%c0_16] : memref<4xf32, #tpu.memory_space<smem>>
    %28 = vector.broadcast %27 : f32 to vector<8x128xf32>
    %29 = arith.addf %26, %28 : vector<8x128xf32>
    %cst_17 = arith.constant 0.000000e+00 : f32
    %30 = vector.broadcast %cst_17 : f32 to vector<8x128xf32>
    %31 = arith.cmpf oge, %29, %30 : vector<8x128xf32>
    %cst_18 = arith.constant 0.00999999977 : f32
    %32 = vector.broadcast %cst_18 : f32 to vector<8x128xf32>
    %33 = arith.mulf %32, %29 : vector<8x128xf32>
    %34 = arith.select %31, %29, %33 : vector<8x128xi1>, vector<8x128xf32>
    %c0_19 = arith.constant 0 : index
    %35 = memref.load %arg10[%c0_19] : memref<4xf32, #tpu.memory_space<smem>>
    %36 = vector.broadcast %35 : f32 to vector<8x128xf32>
    %37 = arith.mulf %34, %36 : vector<8x128xf32>
    %c1 = arith.constant 1 : index
    %c0_20 = arith.constant 0 : index
    %c0_21 = arith.constant 0 : index
    %38 = vector.load %arg1[%c1, %c0_20, %c0_21] : memref<4x8x128xbf16, #tpu.memory_space<vmem>>, vector<1x8x128xbf16>
    %39 = vector.shape_cast %38 : vector<1x8x128xbf16> to vector<8x128xbf16>
    %c0_22 = arith.constant 0 : index
    %c0_23 = arith.constant 0 : index
    %40 = vector.load %arg2[%c0_22, %c0_23] : memref<128x256xbf16, #tpu.memory_space<vmem>>, vector<128x256xbf16>
    %cst_24 = arith.constant dense<0.000000e+00> : vector<8x256xf32>
    %41 = tpu.matmul %39, %40, %cst_24 {dimension_numbers = #tpu.dot_dimension_numbers<[1], [0], [0], [1], [0, 0, 1, 1], [], []>} : vector<8x128xbf16>, vector<128x256xbf16>, vector<8x256xf32> -> vector<8x256xf32>
    %c0_25 = arith.constant 0 : index
    %c0_26 = arith.constant 0 : index
    %42 = vector.load %arg3[%c0_25, %c0_26] : memref<1x256xf32, #tpu.memory_space<vmem>>, vector<1x256xf32>
    %43 = vector.broadcast %42 : vector<1x256xf32> to vector<8x256xf32>
    %44 = arith.addf %41, %43 : vector<8x256xf32>
    %c1_27 = arith.constant 1 : index
    %45 = memref.load %arg4[%c1_27] : memref<4xf32, #tpu.memory_space<smem>>
    %46 = vector.broadcast %45 : f32 to vector<8x256xf32>
    %47 = arith.mulf %44, %46 : vector<8x256xf32>
    %c1_28 = arith.constant 1 : index
    %48 = memref.load %arg5[%c1_28] : memref<4xf32, #tpu.memory_space<smem>>
    %49 = vector.broadcast %48 : f32 to vector<8x256xf32>
    %50 = arith.addf %47, %49 : vector<8x256xf32>
    %cst_29 = arith.constant 0.000000e+00 : f32
    %51 = vector.broadcast %cst_29 : f32 to vector<8x256xf32>
    %52 = arith.cmpf oge, %50, %51 : vector<8x256xf32>
    %cst_30 = arith.constant 0.00999999977 : f32
    %53 = vector.broadcast %cst_30 : f32 to vector<8x256xf32>
    %54 = arith.mulf %53, %50 : vector<8x256xf32>
    %55 = arith.select %52, %50, %54 : vector<8x256xi1>, vector<8x256xf32>
    %56 = arith.truncf %55 : vector<8x256xf32> to vector<8x256xbf16>
    %c0_31 = arith.constant 0 : index
    %c0_32 = arith.constant 0 : index
    %57 = vector.load %arg6[%c0_31, %c0_32] : memref<256x128xbf16, #tpu.memory_space<vmem>>, vector<256x128xbf16>
    %cst_33 = arith.constant dense<0.000000e+00> : vector<8x128xf32>
    %58 = tpu.matmul %56, %57, %cst_33 {dimension_numbers = #tpu.dot_dimension_numbers<[1], [0], [0], [1], [0, 0, 1, 1], [], []>} : vector<8x256xbf16>, vector<256x128xbf16>, vector<8x128xf32> -> vector<8x128xf32>
    %c0_34 = arith.constant 0 : index
    %c0_35 = arith.constant 0 : index
    %59 = vector.load %arg7[%c0_34, %c0_35] : memref<1x128xf32, #tpu.memory_space<vmem>>, vector<1x128xf32>
    %60 = vector.broadcast %59 : vector<1x128xf32> to vector<8x128xf32>
    %61 = arith.addf %58, %60 : vector<8x128xf32>
    %c1_36 = arith.constant 1 : index
    %62 = memref.load %arg8[%c1_36] : memref<4xf32, #tpu.memory_space<smem>>
    %63 = vector.broadcast %62 : f32 to vector<8x128xf32>
    %64 = arith.mulf %61, %63 : vector<8x128xf32>
    %c1_37 = arith.constant 1 : index
    %65 = memref.load %arg9[%c1_37] : memref<4xf32, #tpu.memory_space<smem>>
    %66 = vector.broadcast %65 : f32 to vector<8x128xf32>
    %67 = arith.addf %64, %66 : vector<8x128xf32>
    %cst_38 = arith.constant 0.000000e+00 : f32
    %68 = vector.broadcast %cst_38 : f32 to vector<8x128xf32>
    %69 = arith.cmpf oge, %67, %68 : vector<8x128xf32>
    %cst_39 = arith.constant 0.00999999977 : f32
    %70 = vector.broadcast %cst_39 : f32 to vector<8x128xf32>
    %71 = arith.mulf %70, %67 : vector<8x128xf32>
    %72 = arith.select %69, %67, %71 : vector<8x128xi1>, vector<8x128xf32>
    %c1_40 = arith.constant 1 : index
    %73 = memref.load %arg10[%c1_40] : memref<4xf32, #tpu.memory_space<smem>>
    %74 = vector.broadcast %73 : f32 to vector<8x128xf32>
    %75 = arith.mulf %72, %74 : vector<8x128xf32>
    %76 = arith.addf %37, %75 : vector<8x128xf32>
    %c2 = arith.constant 2 : index
    %c0_41 = arith.constant 0 : index
    %c0_42 = arith.constant 0 : index
    %77 = vector.load %arg1[%c2, %c0_41, %c0_42] : memref<4x8x128xbf16, #tpu.memory_space<vmem>>, vector<1x8x128xbf16>
    %78 = vector.shape_cast %77 : vector<1x8x128xbf16> to vector<8x128xbf16>
    %c0_43 = arith.constant 0 : index
    %c0_44 = arith.constant 0 : index
    %79 = vector.load %arg2[%c0_43, %c0_44] : memref<128x256xbf16, #tpu.memory_space<vmem>>, vector<128x256xbf16>
    %cst_45 = arith.constant dense<0.000000e+00> : vector<8x256xf32>
    %80 = tpu.matmul %78, %79, %cst_45 {dimension_numbers = #tpu.dot_dimension_numbers<[1], [0], [0], [1], [0, 0, 1, 1], [], []>} : vector<8x128xbf16>, vector<128x256xbf16>, vector<8x256xf32> -> vector<8x256xf32>
    %c0_46 = arith.constant 0 : index
    %c0_47 = arith.constant 0 : index
    %81 = vector.load %arg3[%c0_46, %c0_47] : memref<1x256xf32, #tpu.memory_space<vmem>>, vector<1x256xf32>
    %82 = vector.broadcast %81 : vector<1x256xf32> to vector<8x256xf32>
    %83 = arith.addf %80, %82 : vector<8x256xf32>
    %c2_48 = arith.constant 2 : index
    %84 = memref.load %arg4[%c2_48] : memref<4xf32, #tpu.memory_space<smem>>
    %85 = vector.broadcast %84 : f32 to vector<8x256xf32>
    %86 = arith.mulf %83, %85 : vector<8x256xf32>
    %c2_49 = arith.constant 2 : index
    %87 = memref.load %arg5[%c2_49] : memref<4xf32, #tpu.memory_space<smem>>
    %88 = vector.broadcast %87 : f32 to vector<8x256xf32>
    %89 = arith.addf %86, %88 : vector<8x256xf32>
    %cst_50 = arith.constant 0.000000e+00 : f32
    %90 = vector.broadcast %cst_50 : f32 to vector<8x256xf32>
    %91 = arith.cmpf oge, %89, %90 : vector<8x256xf32>
    %cst_51 = arith.constant 0.00999999977 : f32
    %92 = vector.broadcast %cst_51 : f32 to vector<8x256xf32>
    %93 = arith.mulf %92, %89 : vector<8x256xf32>
    %94 = arith.select %91, %89, %93 : vector<8x256xi1>, vector<8x256xf32>
    %95 = arith.truncf %94 : vector<8x256xf32> to vector<8x256xbf16>
    %c0_52 = arith.constant 0 : index
    %c0_53 = arith.constant 0 : index
    %96 = vector.load %arg6[%c0_52, %c0_53] : memref<256x128xbf16, #tpu.memory_space<vmem>>, vector<256x128xbf16>
    %cst_54 = arith.constant dense<0.000000e+00> : vector<8x128xf32>
    %97 = tpu.matmul %95, %96, %cst_54 {dimension_numbers = #tpu.dot_dimension_numbers<[1], [0], [0], [1], [0, 0, 1, 1], [], []>} : vector<8x256xbf16>, vector<256x128xbf16>, vector<8x128xf32> -> vector<8x128xf32>
    %c0_55 = arith.constant 0 : index
    %c0_56 = arith.constant 0 : index
    %98 = vector.load %arg7[%c0_55, %c0_56] : memref<1x128xf32, #tpu.memory_space<vmem>>, vector<1x128xf32>
    %99 = vector.broadcast %98 : vector<1x128xf32> to vector<8x128xf32>
    %100 = arith.addf %97, %99 : vector<8x128xf32>
    %c2_57 = arith.constant 2 : index
    %101 = memref.load %arg8[%c2_57] : memref<4xf32, #tpu.memory_space<smem>>
    %102 = vector.broadcast %101 : f32 to vector<8x128xf32>
    %103 = arith.mulf %100, %102 : vector<8x128xf32>
    %c2_58 = arith.constant 2 : index
    %104 = memref.load %arg9[%c2_58] : memref<4xf32, #tpu.memory_space<smem>>
    %105 = vector.broadcast %104 : f32 to vector<8x128xf32>
    %106 = arith.addf %103, %105 : vector<8x128xf32>
    %cst_59 = arith.constant 0.000000e+00 : f32
    %107 = vector.broadcast %cst_59 : f32 to vector<8x128xf32>
    %108 = arith.cmpf oge, %106, %107 : vector<8x128xf32>
    %cst_60 = arith.constant 0.00999999977 : f32
    %109 = vector.broadcast %cst_60 : f32 to vector<8x128xf32>
    %110 = arith.mulf %109, %106 : vector<8x128xf32>
    %111 = arith.select %108, %106, %110 : vector<8x128xi1>, vector<8x128xf32>
    %c2_61 = arith.constant 2 : index
    %112 = memref.load %arg10[%c2_61] : memref<4xf32, #tpu.memory_space<smem>>
    %113 = vector.broadcast %112 : f32 to vector<8x128xf32>
    %114 = arith.mulf %111, %113 : vector<8x128xf32>
    %115 = arith.addf %76, %114 : vector<8x128xf32>
    %c3 = arith.constant 3 : index
    %c0_62 = arith.constant 0 : index
    %c0_63 = arith.constant 0 : index
    %116 = vector.load %arg1[%c3, %c0_62, %c0_63] : memref<4x8x128xbf16, #tpu.memory_space<vmem>>, vector<1x8x128xbf16>
    %117 = vector.shape_cast %116 : vector<1x8x128xbf16> to vector<8x128xbf16>
    %c0_64 = arith.constant 0 : index
    %c0_65 = arith.constant 0 : index
    %118 = vector.load %arg2[%c0_64, %c0_65] : memref<128x256xbf16, #tpu.memory_space<vmem>>, vector<128x256xbf16>
    %cst_66 = arith.constant dense<0.000000e+00> : vector<8x256xf32>
    %119 = tpu.matmul %117, %118, %cst_66 {dimension_numbers = #tpu.dot_dimension_numbers<[1], [0], [0], [1], [0, 0, 1, 1], [], []>} : vector<8x128xbf16>, vector<128x256xbf16>, vector<8x256xf32> -> vector<8x256xf32>
    %c0_67 = arith.constant 0 : index
    %c0_68 = arith.constant 0 : index
    %120 = vector.load %arg3[%c0_67, %c0_68] : memref<1x256xf32, #tpu.memory_space<vmem>>, vector<1x256xf32>
    %121 = vector.broadcast %120 : vector<1x256xf32> to vector<8x256xf32>
    %122 = arith.addf %119, %121 : vector<8x256xf32>
    %c3_69 = arith.constant 3 : index
    %123 = memref.load %arg4[%c3_69] : memref<4xf32, #tpu.memory_space<smem>>
    %124 = vector.broadcast %123 : f32 to vector<8x256xf32>
    %125 = arith.mulf %122, %124 : vector<8x256xf32>
    %c3_70 = arith.constant 3 : index
    %126 = memref.load %arg5[%c3_70] : memref<4xf32, #tpu.memory_space<smem>>
    %127 = vector.broadcast %126 : f32 to vector<8x256xf32>
    %128 = arith.addf %125, %127 : vector<8x256xf32>
    %cst_71 = arith.constant 0.000000e+00 : f32
    %129 = vector.broadcast %cst_71 : f32 to vector<8x256xf32>
    %130 = arith.cmpf oge, %128, %129 : vector<8x256xf32>
    %cst_72 = arith.constant 0.00999999977 : f32
    %131 = vector.broadcast %cst_72 : f32 to vector<8x256xf32>
    %132 = arith.mulf %131, %128 : vector<8x256xf32>
    %133 = arith.select %130, %128, %132 : vector<8x256xi1>, vector<8x256xf32>
    %134 = arith.truncf %133 : vector<8x256xf32> to vector<8x256xbf16>
    %c0_73 = arith.constant 0 : index
    %c0_74 = arith.constant 0 : index
    %135 = vector.load %arg6[%c0_73, %c0_74] : memref<256x128xbf16, #tpu.memory_space<vmem>>, vector<256x128xbf16>
    %cst_75 = arith.constant dense<0.000000e+00> : vector<8x128xf32>
    %136 = tpu.matmul %134, %135, %cst_75 {dimension_numbers = #tpu.dot_dimension_numbers<[1], [0], [0], [1], [0, 0, 1, 1], [], []>} : vector<8x256xbf16>, vector<256x128xbf16>, vector<8x128xf32> -> vector<8x128xf32>
    %c0_76 = arith.constant 0 : index
    %c0_77 = arith.constant 0 : index
    %137 = vector.load %arg7[%c0_76, %c0_77] : memref<1x128xf32, #tpu.memory_space<vmem>>, vector<1x128xf32>
    %138 = vector.broadcast %137 : vector<1x128xf32> to vector<8x128xf32>
    %139 = arith.addf %136, %138 : vector<8x128xf32>
    %c3_78 = arith.constant 3 : index
    %140 = memref.load %arg8[%c3_78] : memref<4xf32, #tpu.memory_space<smem>>
    %141 = vector.broadcast %140 : f32 to vector<8x128xf32>
    %142 = arith.mulf %139, %141 : vector<8x128xf32>
    %c3_79 = arith.constant 3 : index
    %143 = memref.load %arg9[%c3_79] : memref<4xf32, #tpu.memory_space<smem>>
    %144 = vector.broadcast %143 : f32 to vector<8x128xf32>
    %145 = arith.addf %142, %144 : vector<8x128xf32>
    %cst_80 = arith.constant 0.000000e+00 : f32
    %146 = vector.broadcast %cst_80 : f32 to vector<8x128xf32>
    %147 = arith.cmpf oge, %145, %146 : vector<8x128xf32>
    %cst_81 = arith.constant 0.00999999977 : f32
    %148 = vector.broadcast %cst_81 : f32 to vector<8x128xf32>
    %149 = arith.mulf %148, %145 : vector<8x128xf32>
    %150 = arith.select %147, %145, %149 : vector<8x128xi1>, vector<8x128xf32>
    %c3_82 = arith.constant 3 : index
    %151 = memref.load %arg10[%c3_82] : memref<4xf32, #tpu.memory_space<smem>>
    %152 = vector.broadcast %151 : f32 to vector<8x128xf32>
    %153 = arith.mulf %150, %152 : vector<8x128xf32>
    %154 = arith.addf %115, %153 : vector<8x128xf32>
    %155 = arith.truncf %154 : vector<8x128xf32> to vector<8x128xbf16>
    %c0_83 = arith.constant 0 : index
    %c0_84 = arith.constant 0 : index
    %156 = vector.load %arg11[%c0_83, %c0_84] : memref<128x128xbf16, #tpu.memory_space<vmem>>, vector<128x128xbf16>
    %cst_85 = arith.constant dense<0.000000e+00> : vector<8x128xf32>
    %157 = tpu.matmul %155, %156, %cst_85 {dimension_numbers = #tpu.dot_dimension_numbers<[1], [0], [0], [1], [0, 0, 1, 1], [], []>} : vector<8x128xbf16>, vector<128x128xbf16>, vector<8x128xf32> -> vector<8x128xf32>
    %c0_86 = arith.constant 0 : index
    %c0_87 = arith.constant 0 : index
    %158 = vector.load %arg12[%c0_86, %c0_87] : memref<1x128xf32, #tpu.memory_space<vmem>>, vector<1x128xf32>
    %159 = vector.broadcast %158 : vector<1x128xf32> to vector<8x128xf32>
    %160 = arith.addf %157, %159 : vector<8x128xf32>
    %c0_88 = arith.constant 0 : index
    %c0_89 = arith.constant 0 : index
    %161 = vector.load %arg13[%c0_88, %c0_89] : memref<8x128xf32, #tpu.memory_space<vmem>>, vector<8x128xf32>
    tpu.vector_store %arg13[%c0_88, %c0_89], %160 {strides = array<i32>} : memref<8x128xf32, #tpu.memory_space<vmem>>, vector<8x128xf32>,
    return
  }
  func.func @transform_0(%arg0: i32) -> (i32, i32, i32) {
    %c0_i32 = arith.constant 0 : i32
    %c0_i32_0 = arith.constant 0 : i32
    %c0_i32_1 = arith.constant 0 : i32
    return %c0_i32, %arg0, %c0_i32_0 : i32, i32, i32
  }
  func.func @transform_1(%arg0: i32) -> (i32, i32) {
    %c0_i32 = arith.constant 0 : i32
    %c0_i32_0 = arith.constant 0 : i32
    %c0_i32_1 = arith.constant 0 : i32
    return %c0_i32, %c0_i32_0 : i32, i32
  }
  func.func @transform_2(%arg0: i32) -> (i32, i32) {
    %c0_i32 = arith.constant 0 : i32
    %c0_i32_0 = arith.constant 0 : i32
    %c0_i32_1 = arith.constant 0 : i32
    return %c0_i32, %c0_i32_0 : i32, i32
  }
  func.func @transform_3(%arg0: i32) -> i32 {
    %c0_i32 = arith.constant 0 : i32
    %c0_i32_0 = arith.constant 0 : i32
    return %c0_i32 : i32
  }
  func.func @transform_4(%arg0: i32) -> i32 {
    %c0_i32 = arith.constant 0 : i32
    %c0_i32_0 = arith.constant 0 : i32
    return %c0_i32 : i32
  }
  func.func @transform_5(%arg0: i32) -> (i32, i32) {
    %c0_i32 = arith.constant 0 : i32
    %c0_i32_0 = arith.constant 0 : i32
    %c0_i32_1 = arith.constant 0 : i32
    return %c0_i32, %c0_i32_0 : i32, i32
  }
  func.func @transform_6(%arg0: i32) -> (i32, i32) {
    %c0_i32 = arith.constant 0 : i32
    %c0_i32_0 = arith.constant 0 : i32
    %c0_i32_1 = arith.constant 0 : i32
    return %c0_i32, %c0_i32_0 : i32, i32
  }
  func.func @transform_7(%arg0: i32) -> i32 {
    %c0_i32 = arith.constant 0 : i32
    %c0_i32_0 = arith.constant 0 : i32
    return %c0_i32 : i32
  }
  func.func @transform_8(%arg0: i32) -> i32 {
    %c0_i32 = arith.constant 0 : i32
    %c0_i32_0 = arith.constant 0 : i32
    return %c0_i32 : i32
  }
  func.func @transform_9(%arg0: i32) -> i32 {
    %c0_i32 = arith.constant 0 : i32
    %c0_i32_0 = arith.constant 0 : i32
    return %c0_i32 : i32
  }
  func.func @transform_10(%arg0: i32) -> (i32, i32) {
    %c0_i32 = arith.constant 0 : i32
    %c0_i32_0 = arith.constant 0 : i32
    %c0_i32_1 = arith.constant 0 : i32
    return %c0_i32, %c0_i32_0 : i32, i32
  }
  func.func @transform_11(%arg0: i32) -> (i32, i32) {
    %c0_i32 = arith.constant 0 : i32
    %c0_i32_0 = arith.constant 0 : i32
    %c0_i32_1 = arith.constant 0 : i32
    return %c0_i32, %c0_i32_0 : i32, i32
  }
  func.func @transform_12(%arg0: i32) -> (i32, i32) {
    %c0_i32 = arith.constant 0 : i32
    %c0_i32_0 = arith.constant 0 : i32
    return %arg0, %c0_i32 : i32, i32
  }
}

</mosaic_0001>

<llo_original>
// kernel: tpu_custom_call.1
$region0: #{tpu_custom_call.1}
  #allocation0 [shape = 'u32[]', space=smem, size = 0x4, offset = 0x4, fixed_abs, tag = 'smem constant byte address 0x4 - core index']
  #allocation1 [shape = 'u32[72,128]{1,0:T(1,128)}', space=vmem, size = 0x9000, scoped, tag = 'internal scratch']
  %s0 = inlined_call_operand.hbm [shape: bf16[4,16,128], index: 0, kind: input, shape index: {}]
  %s1 = inlined_call_operand.hbm [shape: bf16[128,256], index: 1, kind: input, shape index: {}]
  %s2 = inlined_call_operand.hbm [shape: f32[1,256], index: 2, kind: input, shape index: {}]
  %s3 = inlined_call_operand.vmem [shape: f32[4], index: 3, kind: input, shape index: {}]
  %s4 = inlined_call_operand.vmem [shape: f32[4], index: 4, kind: input, shape index: {}]
  %s5 = inlined_call_operand.hbm [shape: bf16[256,128], index: 5, kind: input, shape index: {}]
  %s6 = inlined_call_operand.vmem [shape: f32[1,128], index: 6, kind: input, shape index: {}]
  %s7 = inlined_call_operand.vmem [shape: f32[4], index: 7, kind: input, shape index: {}]
  %s8 = inlined_call_operand.vmem [shape: f32[4], index: 8, kind: input, shape index: {}]
  %s9 = inlined_call_operand.vmem [shape: f32[4], index: 9, kind: input, shape index: {}]
  %s10 = inlined_call_operand.hbm [shape: bf16[128,128], index: 10, kind: input, shape index: {}]
  %s11 = inlined_call_operand.vmem [shape: f32[1,128], index: 11, kind: input, shape index: {}]
  %s12 = inlined_call_operand.hbm [shape: f32[16,128], index: 12, kind: output, shape index: {}]
  %s13 = sld [smem:[#allocation0]]
  $region121: #{tpu_custom_call.1} parent=0
    _
  %s15 = ssub.s32 1, %s13
  %s16 = scalar_select 0, %s15, %s13
  $region1: #{tpu_custom_call.1} parent=0
    #allocation2 [shape = 'u8[16384]{0}', space=vmem, size = 0x4000, scoped, tag = 'input window, operand 0']
    #allocation3 [shape = 's32[2]{0}', space=sflag, size = 0x8, scoped, tag = 'scoped memory for tpu_custom_call.1']
    #allocation4 [shape = 's32[2]{0}', space=sflag, size = 0x8, scoped, tag = 'scoped memory for tpu_custom_call.1']
    #allocation5 [shape = 's32[2]{0}', space=sflag, size = 0x8, scoped, tag = 'scoped memory for tpu_custom_call.1']
    #allocation6 [shape = 'u8[65536]{0}', space=vmem, size = 0x10000, scoped, tag = 'input window, operand 1, single buffered']
    #allocation7 [shape = 's32[1]{0}', space=sflag, size = 0x4, scoped, tag = 'scoped memory for tpu_custom_call.1']
    #allocation8 [shape = 'u8[1024]{0}', space=vmem, size = 0x400, scoped, tag = 'input window, operand 2, single buffered']
    #allocation9 [shape = 'u8[512]{0}', space=smem, size = 0x200, scoped, tag = 'input window, operand 3, single buffered']
    #allocation10 [shape = 'u8[512]{0}', space=smem, size = 0x200, scoped, tag = 'input window, operand 4, single buffered']
    #allocation11 [shape = 's32[1]{0}', space=sflag, size = 0x4, scoped, tag = 'scoped memory for tpu_custom_call.1']
    #allocation12 [shape = 'u8[65536]{0}', space=vmem, size = 0x10000, scoped, tag = 'input window, operand 5, single buffered']
    #allocation13 [shape = 's32[1]{0}', space=sflag, size = 0x4, scoped, tag = 'scoped memory for tpu_custom_call.1']
    #allocation14 [shape = 'u8[512]{0}', space=smem, size = 0x200, scoped, tag = 'input window, operand 7, single buffered']
    #allocation15 [shape = 'u8[512]{0}', space=smem, size = 0x200, scoped, tag = 'input window, operand 8, single buffered']
    #allocation16 [shape = 's32[1]{0}', space=sflag, size = 0x4, scoped, tag = 'scoped memory for tpu_custom_call.1']
    #allocation17 [shape = 'u8[512]{0}', space=smem, size = 0x200, scoped, tag = 'input window, operand 9, single buffered']
    #allocation18 [shape = 'u8[32768]{0}', space=vmem, size = 0x8000, scoped, tag = 'input window, operand 10, single buffered']
    #allocation19 [shape = 'u8[8192]{0}', space=vmem, size = 0x2000, scoped, tag = 'output window, operand 0']
    %17 = vsyncpa [#allocation3], 0
    %s18 = scalar_lea.sflag [#allocation3], 1
    %19 = vsyncpa %s18, 0
    %20 = vsyncpa [#allocation7], 0
    %21 = vsyncpa [#allocation5], 0
    %22 = vsyncpa [#allocation11], 0
    %23 = vsyncpa [#allocation13], 0
    %24 = vsyncpa [#allocation16], 0
    %25 = vsyncpa [#allocation4], 0
    %s26 = scalar_lea.sflag [#allocation4], 1
    %27 = vsyncpa %s26, 0
    loop: start=0, step=1, limit=4
    $region2: #{tpu_custom_call.1} parent=1 // loop_pre_header
      _
    $region3: #{tpu_custom_call.1} parent=1 // loop_header
      %s29 = sphi 0, %s33
      %p30 = scmp.ge.s32.totalorder %s29, 4
      %s39 = sphi 0, %s41
      %s42 = sphi 0, %s39
      %s43 = sphi 0, %s42
      %s59 = sphi 0, %s43
      %s63 = sphi 0, %s63
      %s65 = sphi 0, %s63
      %s66 = sphi 0, %s65
      %s80 = sphi 0, %s66
      %s84 = sphi 0, %s84
      %s86 = sphi 0, %s84
      %s87 = sphi 0, %s86
      %s101 = sphi 0, %s87
      %s105 = sphi 0, %s105
      %s107 = sphi 0, %s105
      %s108 = sphi 0, %s107
      %s122 = sphi 0, %s108
      %s126 = sphi 0, %s126
      %s128 = sphi 0, %s126
      %s129 = sphi 0, %s128
      %s143 = sphi 0, %s129
      %s147 = sphi 0, %s147
      %s149 = sphi 0, %s147
      %s150 = sphi 0, %s149
      %s164 = sphi 0, %s150
      %s168 = sphi 0, %s168
      %s170 = sphi 0, %s168
      %s171 = sphi 0, %s170
      %s185 = sphi 0, %s171
      %s189 = sphi 0, %s189
      %s191 = sphi 0, %s189
      %s192 = sphi 0, %s191
      %s206 = sphi 0, %s192
      %s210 = sphi 0, %s210
      %s212 = sphi 0, %s210
      %s213 = sphi 0, %s212
      %s227 = sphi 0, %s213
      %s231 = sphi 0, %s231
      %s233 = sphi 0, %s231
      %s234 = sphi 0, %s233
      %s248 = sphi 0, %s234
      %s252 = sphi 0, %s252
      %s254 = sphi 0, %s252
      %s255 = sphi 0, %s254
      %s269 = sphi 0, %s255
      %s273 = sphi 0, %s273
      %s275 = sphi 0, %s273
      %s276 = sphi 0, %s275
      %s290 = sphi 0, %s276
      %s296 = sphi 0, %s298
      %s299 = sphi 0, %s296
      %s300 = sphi 0, %s299
      %s316 = sphi 0, %s300
    $region4: #{tpu_custom_call.1} parent=1 // loop_header_branch
      %32 = sbr.rel (%p30) target = $region8
    $region5: #{tpu_custom_call.1} parent=1 // loop_body
      %s34 = ssub.s32 %s29, 1
      %s35 = ssub.s32 %s29, 2
      %s36 = sadd.s32 %s29, 1
      %s37 = ssub.s32 %s29, %s36
      %p38 = scmp.eq.s32.totalorder %s37, 0
      %s40 = sadd.s32 %s39, 1
      %s41 = scalar_select %p38, %s39, %s40
      %p44 = pneg %p38
      %p45 = scmp.eq.s32.totalorder %s29, 1
      %p46 = por %p44, %p45
      %p47 = scmp.ne.s32.totalorder %s39, %s42
      %p48 = scmp.eq.s32.totalorder %s29, 0
      %p49 = por %p47, %p48
      %p50 = scmp.ne.s32.totalorder %s39, %s42
      %p51 = scmp.eq.s32.totalorder %s34, 1
      %p52 = por %p50, %p51
      %p53 = scmp.ne.s32.totalorder %s42, %s43
      %p54 = scmp.eq.s32.totalorder %s34, 0
      %p55 = por %p53, %p54
      %p56 = scmp.ne.s32.totalorder %s42, %s43
      %p57 = scmp.eq.s32.totalorder %s35, 1
      %p58 = por %p56, %p57
      %p60 = scmp.ne.s32.totalorder %s43, %s59
      %p61 = scmp.eq.s32.totalorder %s35, 0
      %p62 = por %p60, %p61
      %s64 = sadd.s32 %s63, 1
      %p67 = scmp.eq.s32.totalorder %s29, 1
      %p68 = scmp.ne.s32.totalorder %s63, %s65
      %p69 = scmp.eq.s32.totalorder %s29, 0
      %p70 = por %p68, %p69
      %p71 = scmp.ne.s32.totalorder %s63, %s65
      %p72 = scmp.eq.s32.totalorder %s34, 1
      %p73 = por %p71, %p72
      %p74 = scmp.ne.s32.totalorder %s65, %s66
      %p75 = scmp.eq.s32.totalorder %s34, 0
      %p76 = por %p74, %p75
      %p77 = scmp.ne.s32.totalorder %s65, %s66
      %p78 = scmp.eq.s32.totalorder %s35, 1
      %p79 = por %p77, %p78
      %p81 = scmp.ne.s32.totalorder %s66, %s80
      %p82 = scmp.eq.s32.totalorder %s35, 0
      %p83 = por %p81, %p82
      %s85 = sadd.s32 %s84, 1
      %p88 = scmp.eq.s32.totalorder %s29, 1
      %p89 = scmp.ne.s32.totalorder %s84, %s86
      %p90 = scmp.eq.s32.totalorder %s29, 0
      %p91 = por %p89, %p90
      %p92 = scmp.ne.s32.totalorder %s84, %s86
      %p93 = scmp.eq.s32.totalorder %s34, 1
      %p94 = por %p92, %p93
      %p95 = scmp.ne.s32.totalorder %s86, %s87
      %p96 = scmp.eq.s32.totalorder %s34, 0
      %p97 = por %p95, %p96
      %p98 = scmp.ne.s32.totalorder %s86, %s87
      %p99 = scmp.eq.s32.totalorder %s35, 1
      %p100 = por %p98, %p99
      %p102 = scmp.ne.s32.totalorder %s87, %s101
      %p103 = scmp.eq.s32.totalorder %s35, 0
      %p104 = por %p102, %p103
      %s106 = sadd.s32 %s105, 1
      %p109 = scmp.eq.s32.totalorder %s29, 1
      %p110 = scmp.ne.s32.totalorder %s105, %s107
      %p111 = scmp.eq.s32.totalorder %s29, 0
      %p112 = por %p110, %p111
      %p113 = scmp.ne.s32.totalorder %s105, %s107
      %p114 = scmp.eq.s32.totalorder %s34, 1
      %p115 = por %p113, %p114
      %p116 = scmp.ne.s32.totalorder %s107, %s108
      %p117 = scmp.eq.s32.totalorder %s34, 0
      %p118 = por %p116, %p117
      %p119 = scmp.ne.s32.totalorder %s107, %s108
      %p120 = scmp.eq.s32.totalorder %s35, 1
      %p121 = por %p119, %p120
      %p123 = scmp.ne.s32.totalorder %s108, %s122
      %p124 = scmp.eq.s32.totalorder %s35, 0
      %p125 = por %p123, %p124
      %s127 = sadd.s32 %s126, 1
      %p130 = scmp.eq.s32.totalorder %s29, 1
      %p131 = scmp.ne.s32.totalorder %s126, %s128
      %p132 = scmp.eq.s32.totalorder %s29, 0
      %p133 = por %p131, %p132
      %p134 = scmp.ne.s32.totalorder %s126, %s128
      %p135 = scmp.eq.s32.totalorder %s34, 1
      %p136 = por %p134, %p135
      %p137 = scmp.ne.s32.totalorder %s128, %s129
      %p138 = scmp.eq.s32.totalorder %s34, 0
      %p139 = por %p137, %p138
      %p140 = scmp.ne.s32.totalorder %s128, %s129
      %p141 = scmp.eq.s32.totalorder %s35, 1
      %p142 = por %p140, %p141
      %p144 = scmp.ne.s32.totalorder %s129, %s143
      %p145 = scmp.eq.s32.totalorder %s35, 0
      %p146 = por %p144, %p145
      %s148 = sadd.s32 %s147, 1
      %p151 = scmp.eq.s32.totalorder %s29, 1
      %p152 = scmp.ne.s32.totalorder %s147, %s149
      %p153 = scmp.eq.s32.totalorder %s29, 0
      %p154 = por %p152, %p153
      %p155 = scmp.ne.s32.totalorder %s147, %s149
      %p156 = scmp.eq.s32.totalorder %s34, 1
      %p157 = por %p155, %p156
      %p158 = scmp.ne.s32.totalorder %s149, %s150
      %p159 = scmp.eq.s32.totalorder %s34, 0
      %p160 = por %p158, %p159
      %p161 = scmp.ne.s32.totalorder %s149, %s150
      %p162 = scmp.eq.s32.totalorder %s35, 1
      %p163 = por %p161, %p162
      %p165 = scmp.ne.s32.totalorder %s150, %s164
      %p166 = scmp.eq.s32.totalorder %s35, 0
      %p167 = por %p165, %p166
      %s169 = sadd.s32 %s168, 1
      %p172 = scmp.eq.s32.totalorder %s29, 1
      %p173 = scmp.ne.s32.totalorder %s168, %s170
      %p174 = scmp.eq.s32.totalorder %s29, 0
      %p175 = por %p173, %p174
      %p176 = scmp.ne.s32.totalorder %s168, %s170
      %p177 = scmp.eq.s32.totalorder %s34, 1
      %p178 = por %p176, %p177
      %p179 = scmp.ne.s32.totalorder %s170, %s171
      %p180 = scmp.eq.s32.totalorder %s34, 0
      %p181 = por %p179, %p180
      %p182 = scmp.ne.s32.totalorder %s170, %s171
      %p183 = scmp.eq.s32.totalorder %s35, 1
      %p184 = por %p182, %p183
      %p186 = scmp.ne.s32.totalorder %s171, %s185
      %p187 = scmp.eq.s32.totalorder %s35, 0
      %p188 = por %p186, %p187
      %s190 = sadd.s32 %s189, 1
      %p193 = scmp.eq.s32.totalorder %s29, 1
      %p194 = scmp.ne.s32.totalorder %s189, %s191
      %p195 = scmp.eq.s32.totalorder %s29, 0
      %p196 = por %p194, %p195
      %p197 = scmp.ne.s32.totalorder %s189, %s191
      %p198 = scmp.eq.s32.totalorder %s34, 1
      %p199 = por %p197, %p198
      %p200 = scmp.ne.s32.totalorder %s191, %s192
      %p201 = scmp.eq.s32.totalorder %s34, 0
      %p202 = por %p200, %p201
      %p203 = scmp.ne.s32.totalorder %s191, %s192
      %p204 = scmp.eq.s32.totalorder %s35, 1
      %p205 = por %p203, %p204
      %p207 = scmp.ne.s32.totalorder %s192, %s206
      %p208 = scmp.eq.s32.totalorder %s35, 0
      %p209 = por %p207, %p208
      %s211 = sadd.s32 %s210, 1
      %p214 = scmp.eq.s32.totalorder %s29, 1
      %p215 = scmp.ne.s32.totalorder %s210, %s212
      %p216 = scmp.eq.s32.totalorder %s29, 0
      %p217 = por %p215, %p216
      %p218 = scmp.ne.s32.totalorder %s210, %s212
      %p219 = scmp.eq.s32.totalorder %s34, 1
      %p220 = por %p218, %p219
      %p221 = scmp.ne.s32.totalorder %s212, %s213
      %p222 = scmp.eq.s32.totalorder %s34, 0
      %p223 = por %p221, %p222
      %p224 = scmp.ne.s32.totalorder %s212, %s213
      %p225 = scmp.eq.s32.totalorder %s35, 1
      %p226 = por %p224, %p225
      %p228 = scmp.ne.s32.totalorder %s213, %s227
      %p229 = scmp.eq.s32.totalorder %s35, 0
      %p230 = por %p228, %p229
      %s232 = sadd.s32 %s231, 1
      %p235 = scmp.eq.s32.totalorder %s29, 1
      %p236 = scmp.ne.s32.totalorder %s231, %s233
      %p237 = scmp.eq.s32.totalorder %s29, 0
      %p238 = por %p236, %p237
      %p239 = scmp.ne.s32.totalorder %s231, %s233
      %p240 = scmp.eq.s32.totalorder %s34, 1
      %p241 = por %p239, %p240
      %p242 = scmp.ne.s32.totalorder %s233, %s234
      %p243 = scmp.eq.s32.totalorder %s34, 0
      %p244 = por %p242, %p243
      %p245 = scmp.ne.s32.totalorder %s233, %s234
      %p246 = scmp.eq.s32.totalorder %s35, 1
      %p247 = por %p245, %p246
      %p249 = scmp.ne.s32.totalorder %s234, %s248
      %p250 = scmp.eq.s32.totalorder %s35, 0
      %p251 = por %p249, %p250
      %s253 = sadd.s32 %s252, 1
      %p256 = scmp.eq.s32.totalorder %s29, 1
      %p257 = scmp.ne.s32.totalorder %s252, %s254
      %p258 = scmp.eq.s32.totalorder %s29, 0
      %p259 = por %p257, %p258
      %p260 = scmp.ne.s32.totalorder %s252, %s254
      %p261 = scmp.eq.s32.totalorder %s34, 1
      %p262 = por %p260, %p261
      %p263 = scmp.ne.s32.totalorder %s254, %s255
      %p264 = scmp.eq.s32.totalorder %s34, 0
      %p265 = por %p263, %p264
      %p266 = scmp.ne.s32.totalorder %s254, %s255
      %p267 = scmp.eq.s32.totalorder %s35, 1
      %p268 = por %p266, %p267
      %p270 = scmp.ne.s32.totalorder %s255, %s269
      %p271 = scmp.eq.s32.totalorder %s35, 0
      %p272 = por %p270, %p271
      %s274 = sadd.s32 %s273, 1
      %p277 = scmp.eq.s32.totalorder %s29, 1
      %p278 = scmp.ne.s32.totalorder %s273, %s275
      %p279 = scmp.eq.s32.totalorder %s29, 0
      %p280 = por %p278, %p279
      %p281 = scmp.ne.s32.totalorder %s273, %s275
      %p282 = scmp.eq.s32.totalorder %s34, 1
      %p283 = por %p281, %p282
      %p284 = scmp.ne.s32.totalorder %s275, %s276
      %p285 = scmp.eq.s32.totalorder %s34, 0
      %p286 = por %p284, %p285
      %p287 = scmp.ne.s32.totalorder %s275, %s276
      %p288 = scmp.eq.s32.totalorder %s35, 1
      %p289 = por %p287, %p288
      %p291 = scmp.ne.s32.totalorder %s276, %s290
      %p292 = scmp.eq.s32.totalorder %s35, 0
      %p293 = por %p291, %p292
      %s294 = ssub.s32 %s29, %s36
      %p295 = scmp.eq.s32.totalorder %s294, 0
      %s297 = sadd.s32 %s296, 1
      %s298 = scalar_select %p295, %s296, %s297
      %p301 = pneg %p295
      %p302 = scmp.eq.s32.totalorder %s29, 1
      %p303 = por %p301, %p302
      %p304 = scmp.ne.s32.totalorder %s296, %s299
      %p305 = scmp.eq.s32.totalorder %s29, 0
      %p306 = por %p304, %p305
      %p307 = scmp.ne.s32.totalorder %s296, %s299
      %p308 = scmp.eq.s32.totalorder %s34, 1
      %p309 = por %p307, %p308
      %p310 = scmp.ne.s32.totalorder %s299, %s300
      %p311 = scmp.eq.s32.totalorder %s34, 0
      %p312 = por %p310, %p311
      %p313 = scmp.ne.s32.totalorder %s299, %s300
      %p314 = scmp.eq.s32.totalorder %s35, 1
      %p315 = por %p313, %p314
      %p317 = scmp.ne.s32.totalorder %s300, %s316
      %p318 = scmp.eq.s32.totalorder %s35, 0
      %p319 = por %p317, %p318
      %p320 = scmp.le.s32.totalorder 1, %s29
      %p321 = scmp.lt.s32.totalorder %s29, 3
      %p322 = pnand %p320, %p321
      %p323 = pneg %p322
      // Predicated region
      $region9: #{tpu_custom_call.1} parent=5 // pred_check
        _
      $region10: #{tpu_custom_call.1} parent=5 // pred_check_branch
        %325 = sbr.rel (%p322) target = $region12
      $region11: #{tpu_custom_call.1} parent=5 // pred_region
        %s326 = ssub.s32 %s29, 1
        // Predicated region
        $region13: #{tpu_custom_call.1} parent=11 // pred_check
          %p327 = pneg %p76
        $region14: #{tpu_custom_call.1} parent=11 // pred_check_branch
          %329 = sbr.rel (%p327) target = $region16
        $region15: #{tpu_custom_call.1} parent=11 // pred_region
          %331 = vsyncadd [#allocation7], 0
          %s332 = sshll.u32 %s1, 4
          %s333 = int_to_ptr.hbm [resolvable:$true] %s332
          %s334 = sshll.u32 [#allocation6], 4
          %s335 = int_to_ptr.vmem [resolvable:$true] %s334
          %340 = dma.hbm_to_vmem [thread:$0]  %s333, 2048, %s335, [#allocation7], 128, 128, 8
        $region16: #{tpu_custom_call.1} parent=11 // pred_fallthru
          _
        // Predicated region
        $region17: #{tpu_custom_call.1} parent=11 // pred_check
          %p341 = pneg %p97
        $region18: #{tpu_custom_call.1} parent=11 // pred_check_branch
          %343 = sbr.rel (%p341) target = $region20
        $region19: #{tpu_custom_call.1} parent=11 // pred_region
          %345 = vsyncadd [#allocation7], 0
          %s347 = sshll.u32 %s2, 4
          %s348 = int_to_ptr.hbm [resolvable:$true] %s347
          %s349 = sshll.u32 [#allocation8], 4
          %s350 = int_to_ptr.vmem [resolvable:$true] %s349
          %352 = dma.hbm_to_vmem [thread:$0]  %s348, 32, %s350, [#allocation7]
        $region20: #{tpu_custom_call.1} parent=11 // pred_fallthru
          _
        // Predicated region
        $region21: #{tpu_custom_call.1} parent=11 // pred_check
          %p353 = pneg %p118
        $region22: #{tpu_custom_call.1} parent=11 // pred_check_branch
          %355 = sbr.rel (%p353) target = $region24
        $region23: #{tpu_custom_call.1} parent=11 // pred_region
          %357 = vsyncadd [#allocation5], 0
          %s359 = sshll.u32 %s3, 4
          %s360 = int_to_ptr.vmem [resolvable:$true] %s359
          %362 = dma.vmem_to_smem %s360, 16, [#allocation9], [#allocation5]
        $region24: #{tpu_custom_call.1} parent=11 // pred_fallthru
          _
        // Predicated region
        $region25: #{tpu_custom_call.1} parent=11 // pred_check
          %p363 = pneg %p139
        $region26: #{tpu_custom_call.1} parent=11 // pred_check_branch
          %365 = sbr.rel (%p363) target = $region28
        $region27: #{tpu_custom_call.1} parent=11 // pred_region
          %367 = vsyncadd [#allocation11], 0
          %s369 = sshll.u32 %s4, 4
          %s370 = int_to_ptr.vmem [resolvable:$true] %s369
          %372 = dma.vmem_to_smem %s370, 16, [#allocation10], [#allocation11]
        $region28: #{tpu_custom_call.1} parent=11 // pred_fallthru
          _
        // Predicated region
        $region29: #{tpu_custom_call.1} parent=11 // pred_check
          %p373 = pneg %p160
        $region30: #{tpu_custom_call.1} parent=11 // pred_check_branch
          %375 = sbr.rel (%p373) target = $region32
        $region31: #{tpu_custom_call.1} parent=11 // pred_region
          %377 = vsyncadd [#allocation13], 0
          %s378 = sshll.u32 %s5, 4
          %s379 = int_to_ptr.hbm [resolvable:$true] %s378
          %s380 = sshll.u32 [#allocation12], 4
          %s381 = int_to_ptr.vmem [resolvable:$true] %s380
          %386 = dma.hbm_to_vmem [thread:$0]  %s379, 2048, %s381, [#allocation13], 64, 64, 4
        $region32: #{tpu_custom_call.1} parent=11 // pred_fallthru
          _
        // Predicated region
        $region33: #{tpu_custom_call.1} parent=11 // pred_check
          %p387 = pneg %p181
        $region34: #{tpu_custom_call.1} parent=11 // pred_check_branch
          %389 = sbr.rel (%p387) target = $region36
        $region35: #{tpu_custom_call.1} parent=11 // pred_region
          _
        $region36: #{tpu_custom_call.1} parent=11 // pred_fallthru
          _
        // Predicated region
        $region37: #{tpu_custom_call.1} parent=11 // pred_check
          %p390 = pneg %p202
        $region38: #{tpu_custom_call.1} parent=11 // pred_check_branch
          %392 = sbr.rel (%p390) target = $region40
        $region39: #{tpu_custom_call.1} parent=11 // pred_region
          %394 = vsyncadd [#allocation11], 0
          %s396 = sshll.u32 %s7, 4
          %s397 = int_to_ptr.vmem [resolvable:$true] %s396
          %399 = dma.vmem_to_smem %s397, 16, [#allocation14], [#allocation11]
        $region40: #{tpu_custom_call.1} parent=11 // pred_fallthru
          _
        // Predicated region
        $region41: #{tpu_custom_call.1} parent=11 // pred_check
          %p400 = pneg %p223
        $region42: #{tpu_custom_call.1} parent=11 // pred_check_branch
          %402 = sbr.rel (%p400) target = $region44
        $region43: #{tpu_custom_call.1} parent=11 // pred_region
          %404 = vsyncadd [#allocation16], 0
          %s406 = sshll.u32 %s8, 4
          %s407 = int_to_ptr.vmem [resolvable:$true] %s406
          %409 = dma.vmem_to_smem %s407, 16, [#allocation15], [#allocation16]
        $region44: #{tpu_custom_call.1} parent=11 // pred_fallthru
          _
        // Predicated region
        $region45: #{tpu_custom_call.1} parent=11 // pred_check
          %p410 = pneg %p244
        $region46: #{tpu_custom_call.1} parent=11 // pred_check_branch
          %412 = sbr.rel (%p410) target = $region48
        $region47: #{tpu_custom_call.1} parent=11 // pred_region
          %414 = vsyncadd [#allocation16], 0
          %s416 = sshll.u32 %s9, 4
          %s417 = int_to_ptr.vmem [resolvable:$true] %s416
          %419 = dma.vmem_to_smem %s417, 16, [#allocation17], [#allocation16]
        $region48: #{tpu_custom_call.1} parent=11 // pred_fallthru
          _
        // Predicated region
        $region49: #{tpu_custom_call.1} parent=11 // pred_check
          %p420 = pneg %p265
        $region50: #{tpu_custom_call.1} parent=11 // pred_check_branch
          %422 = sbr.rel (%p420) target = $region52
        $region51: #{tpu_custom_call.1} parent=11 // pred_region
          %424 = vsyncadd [#allocation13], 0
          %s425 = sshll.u32 %s10, 4
          %s426 = int_to_ptr.hbm [resolvable:$true] %s425
          %s427 = sshll.u32 [#allocation18], 4
          %s428 = int_to_ptr.vmem [resolvable:$true] %s427
          %433 = dma.hbm_to_vmem [thread:$0]  %s426, 1024, %s428, [#allocation13], 64, 64, 4
        $region52: #{tpu_custom_call.1} parent=11 // pred_fallthru
          _
        // Predicated region
        $region53: #{tpu_custom_call.1} parent=11 // pred_check
          %p434 = pneg %p286
        $region54: #{tpu_custom_call.1} parent=11 // pred_check_branch
          %436 = sbr.rel (%p434) target = $region56
        $region55: #{tpu_custom_call.1} parent=11 // pred_region
          _
        $region56: #{tpu_custom_call.1} parent=11 // pred_fallthru
          _
      $region12: #{tpu_custom_call.1} parent=5 // pred_fallthru
        _
      %p437 = scmp.lt.s32.totalorder %s29, 2
      // Predicated region
      $region57: #{tpu_custom_call.1} parent=5 // pred_check
        %p438 = pneg %p437
      $region58: #{tpu_custom_call.1} parent=5 // pred_check_branch
        %440 = sbr.rel (%p438) target = $region60
      $region59: #{tpu_custom_call.1} parent=5 // pred_region
        // Predicated region
        $region61: #{tpu_custom_call.1} parent=59 // pred_check
          %p441 = pneg %p49
        $region62: #{tpu_custom_call.1} parent=59 // pred_check_branch
          %443 = sbr.rel (%p441) target = $region64
        $region63: #{tpu_custom_call.1} parent=59 // pred_region
          %s444 = sand.u32 %s39, 1
          %s445 = scalar_lea.sflag [#allocation3], %s444
          %s446 = sand.u32 %s39, 1
          %s447 = smul.addr %s446, 16
          %s448 = scalar_lea.vmem [#allocation2], %s447
          %450 = vsyncadd %s445, 0
          %s451 = smul.addr %s29, 4
          %s452 = scalar_lea.hbm %s0, %s451
          %s453 = sshll.u32 %s452, 4
          %s454 = int_to_ptr.hbm [resolvable:$true] %s453
          %s455 = sshll.u32 %s448, 4
          %s456 = int_to_ptr.vmem [resolvable:$true] %s455
          %461 = dma.hbm_to_vmem [thread:$0]  %s454, 256, %s456, %s445, 128, 64, 4
        $region64: #{tpu_custom_call.1} parent=59 // pred_fallthru
          _
      $region60: #{tpu_custom_call.1} parent=5 // pred_fallthru
        _
      %p462 = scmp.le.s32.totalorder 1, %s29
      %p463 = scmp.lt.s32.totalorder %s29, 3
      %p464 = pnand %p462, %p463
      %p465 = pneg %p464
      // Predicated region
      $region65: #{tpu_custom_call.1} parent=5 // pred_check
        _
      $region66: #{tpu_custom_call.1} parent=5 // pred_check_branch
        %467 = sbr.rel (%p464) target = $region68
      $region67: #{tpu_custom_call.1} parent=5 // pred_region
        %s468 = ssub.s32 %s29, 1
        %s469 = sand.u32 %s42, 1
        %s470 = scalar_lea.sflag [#allocation3], %s469
        %s471 = sand.u32 %s42, 1
        %s472 = smul.addr %s471, 16
        %s473 = scalar_lea.vmem [#allocation2], %s472
        // Predicated region
        $region69: #{tpu_custom_call.1} parent=67 // pred_check
          %p474 = pneg %p55
        $region70: #{tpu_custom_call.1} parent=67 // pred_check_branch
          %476 = sbr.rel (%p474) target = $region72
        $region71: #{tpu_custom_call.1} parent=67 // pred_region
          %478 = dma.done %s470, 256
        $region72: #{tpu_custom_call.1} parent=67 // pred_fallthru
          _
        // Predicated region
        $region73: #{tpu_custom_call.1} parent=67 // pred_check
          %p479 = pneg %p76
        $region74: #{tpu_custom_call.1} parent=67 // pred_check_branch
          %481 = sbr.rel (%p479) target = $region76
        $region75: #{tpu_custom_call.1} parent=67 // pred_region
          %483 = dma.done [#allocation7], 2048
        $region76: #{tpu_custom_call.1} parent=67 // pred_fallthru
          _
        // Predicated region
        $region77: #{tpu_custom_call.1} parent=67 // pred_check
          %p484 = pneg %p97
        $region78: #{tpu_custom_call.1} parent=67 // pred_check_branch
          %486 = sbr.rel (%p484) target = $region80
        $region79: #{tpu_custom_call.1} parent=67 // pred_region
          %488 = dma.done [#allocation7], 32
        $region80: #{tpu_custom_call.1} parent=67 // pred_fallthru
          _
        // Predicated region
        $region81: #{tpu_custom_call.1} parent=67 // pred_check
          %p489 = pneg %p118
        $region82: #{tpu_custom_call.1} parent=67 // pred_check_branch
          %491 = sbr.rel (%p489) target = $region84
        $region83: #{tpu_custom_call.1} parent=67 // pred_region
          %493 = dma.done [#allocation5], 16
        $region84: #{tpu_custom_call.1} parent=67 // pred_fallthru
          _
        // Predicated region
        $region85: #{tpu_custom_call.1} parent=67 // pred_check
          %p494 = pneg %p139
        $region86: #{tpu_custom_call.1} parent=67 // pred_check_branch
          %496 = sbr.rel (%p494) target = $region88
        $region87: #{tpu_custom_call.1} parent=67 // pred_region
          %498 = dma.done [#allocation11], 16
        $region88: #{tpu_custom_call.1} parent=67 // pred_fallthru
          _
        // Predicated region
        $region89: #{tpu_custom_call.1} parent=67 // pred_check
          %p499 = pneg %p160
        $region90: #{tpu_custom_call.1} parent=67 // pred_check_branch
          %501 = sbr.rel (%p499) target = $region92
        $region91: #{tpu_custom_call.1} parent=67 // pred_region
          %503 = dma.done [#allocation13], 2048
        $region92: #{tpu_custom_call.1} parent=67 // pred_fallthru
          _
        // Predicated region
        $region93: #{tpu_custom_call.1} parent=67 // pred_check
          %p504 = pneg %p202
        $region94: #{tpu_custom_call.1} parent=67 // pred_check_branch
          %506 = sbr.rel (%p504) target = $region96
        $region95: #{tpu_custom_call.1} parent=67 // pred_region
          %508 = dma.done [#allocation11], 16
        $region96: #{tpu_custom_call.1} parent=67 // pred_fallthru
          _
        // Predicated region
        $region97: #{tpu_custom_call.1} parent=67 // pred_check
          %p509 = pneg %p223
        $region98: #{tpu_custom_call.1} parent=67 // pred_check_branch
          %511 = sbr.rel (%p509) target = $region100
        $region99: #{tpu_custom_call.1} parent=67 // pred_region
          %513 = dma.done [#allocation16], 16
        $region100: #{tpu_custom_call.1} parent=67 // pred_fallthru
          _
        // Predicated region
        $region101: #{tpu_custom_call.1} parent=67 // pred_check
          %p514 = pneg %p244
        $region102: #{tpu_custom_call.1} parent=67 // pred_check_branch
          %516 = sbr.rel (%p514) target = $region104
        $region103: #{tpu_custom_call.1} parent=67 // pred_region
          %518 = dma.done [#allocation16], 16
        $region104: #{tpu_custom_call.1} parent=67 // pred_fallthru
          _
        // Predicated region
        $region105: #{tpu_custom_call.1} parent=67 // pred_check
          %p519 = pneg %p265
        $region106: #{tpu_custom_call.1} parent=67 // pred_check_branch
          %521 = sbr.rel (%p519) target = $region108
        $region107: #{tpu_custom_call.1} parent=67 // pred_region
          %523 = dma.done [#allocation13], 1024
        $region108: #{tpu_custom_call.1} parent=67 // pred_fallthru
          _
        %524 = sfence
        %s525 = sand.u32 %s42, 1
        %s526 = scalar_lea.sflag [#allocation3], %s525
        %s527 = sand.u32 %s42, 1
        %s528 = smul.addr %s527, 16
        %s529 = scalar_lea.vmem [#allocation2], %s528
        %p530 = pneg %p55
        %p531 = pneg %p52
        %p532 = pneg %p76
        %p533 = pneg %p73
        %p534 = pneg %p97
        %p535 = pneg %p94
        %p536 = pneg %p118
        %p537 = pneg %p115
        %p538 = pneg %p139
        %p539 = pneg %p136
        %p540 = pneg %p160
        %p541 = pneg %p157
        %p542 = pneg %p181
        %p543 = pneg %p178
        %p544 = pneg %p202
        %p545 = pneg %p199
        %p546 = pneg %p223
        %p547 = pneg %p220
        %p548 = pneg %p244
        %p549 = pneg %p241
        %p550 = pneg %p265
        %p551 = pneg %p262
        %p552 = pneg %p286
        %p553 = pneg %p283
        %p554 = pneg %p312
        %p555 = pneg %p309
        %s556 = sand.u32 %s299, 1
        %s557 = scalar_lea.sflag [#allocation4], %s556
        %s558 = sand.u32 %s299, 1
        %s559 = smul.addr %s558, 8
        %s560 = scalar_lea.vmem [#allocation19], %s559
        %v561 = vld [vmem:[%s473] sm:$0xf]
        %v562 = vld [vmem:[#allocation6] sm:$0xff]
        %v563 = vld [vmem:[#allocation6 + $0x8] sm:$0xff]
        %v564 = vld [vmem:[#allocation6 + $0x10] sm:$0xff]
        %v565 = vld [vmem:[#allocation6 + $0x18] sm:$0xff]
        %v566 = vld [vmem:[#allocation6 + $0x20] sm:$0xff]
        %v567 = vld [vmem:[#allocation6 + $0x28] sm:$0xff]
        %v568 = vld [vmem:[#allocation6 + $0x30] sm:$0xff]
        %v569 = vld [vmem:[#allocation6 + $0x38] sm:$0xff]
        %v570 = vld [vmem:[#allocation6 + $0x40] sm:$0xff]
        %v571 = vld [vmem:[#allocation6 + $0x48] sm:$0xff]
        %v572 = vld [vmem:[#allocation6 + $0x50] sm:$0xff]
        %v573 = vld [vmem:[#allocation6 + $0x58] sm:$0xff]
        %v574 = vld [vmem:[#allocation6 + $0x60] sm:$0xff]
        %v575 = vld [vmem:[#allocation6 + $0x68] sm:$0xff]
        %v576 = vld [vmem:[#allocation6 + $0x70] sm:$0xff]
        %v577 = vld [vmem:[#allocation6 + $0x78] sm:$0xff]
        %v578 = vld [vmem:[#allocation8] sm:$0x3]
        %v580 = vperm.slane %v578, 0
        %v581 = vperm.slane %v578, 1
        %v600 = vunpack.c.l.b16 %v562
        %v601 = vunpack.c.h.b16 %v562
        %v602 = vunpack.c.l.b16 %v563
        %v603 = vunpack.c.h.b16 %v563
        %v604 = vunpack.c.l.b16 %v564
        %v605 = vunpack.c.h.b16 %v564
        %v606 = vunpack.c.l.b16 %v565
        %v607 = vunpack.c.h.b16 %v565
        %v608 = vunpack.c.l.b16 %v566
        %v609 = vunpack.c.h.b16 %v566
        %v610 = vunpack.c.l.b16 %v567
        %v611 = vunpack.c.h.b16 %v567
        %v612 = vunpack.c.l.b16 %v568
        %v613 = vunpack.c.h.b16 %v568
        %v614 = vunpack.c.l.b16 %v569
        %v615 = vunpack.c.h.b16 %v569
        %v616 = vunpack.c.l.b16 %v570
        %v617 = vunpack.c.h.b16 %v570
        %v618 = vunpack.c.l.b16 %v571
        %v619 = vunpack.c.h.b16 %v571
        %v620 = vunpack.c.l.b16 %v572
        %v621 = vunpack.c.h.b16 %v572
        %v622 = vunpack.c.l.b16 %v573
        %v623 = vunpack.c.h.b16 %v573
        %v624 = vunpack.c.l.b16 %v574
        %v625 = vunpack.c.h.b16 %v574
        %v626 = vunpack.c.l.b16 %v575
        %v627 = vunpack.c.h.b16 %v575
        %v628 = vunpack.c.l.b16 %v576
        %v629 = vunpack.c.h.b16 %v576
        %v630 = vunpack.c.l.b16 %v577
        %v631 = vunpack.c.h.b16 %v577
        %v632 = vpack.c.b16 %v602, %v600
        %v633 = vpack.c.b16 %v603, %v601
        %v634 = vpack.c.b16 %v606, %v604
        %v635 = vpack.c.b16 %v607, %v605
        %v636 = vpack.c.b16 %v610, %v608
        %v637 = vpack.c.b16 %v611, %v609
        %v638 = vpack.c.b16 %v614, %v612
        %v639 = vpack.c.b16 %v615, %v613
        %v640 = vpack.c.b16 %v618, %v616
        %v641 = vpack.c.b16 %v619, %v617
        %v642 = vpack.c.b16 %v622, %v620
        %v643 = vpack.c.b16 %v623, %v621
        %v644 = vpack.c.b16 %v626, %v624
        %v645 = vpack.c.b16 %v627, %v625
        %v646 = vpack.c.b16 %v630, %v628
        %v647 = vpack.c.b16 %v631, %v629
        %664 = vmatpush.bf16.msra.mxu0 %v646
        %665 = vmatpush.bf16.msra.mxu0 %v644
        %666 = vmatpush.bf16.msra.mxu0 %v642
        %667 = vmatpush.bf16.msra.mxu0 %v640
        %668 = vmatpush.bf16.msra.mxu0 %v638
        %669 = vmatpush.bf16.msra.mxu0 %v636
        %670 = vmatpush.bf16.msra.mxu0 %v634
        %671 = vmatpush.bf16.msra.mxu0 %v632
        %672 = vmatmul.bf16.gmra.mxu0 %v561
        %v673 = vpop.f32.mrf.mxu0
        %v674 = vadd.f32 %v580, %v673
        %v675 = vpop.f32.mrf.mxu0
        %676 = vdwg.mxu0
        %677 = vmatpush.bf16.msra.mxu0 %v647
        %678 = vmatpush.bf16.msra.mxu0 %v645
        %679 = vmatpush.bf16.msra.mxu0 %v643
        %680 = vmatpush.bf16.msra.mxu0 %v641
        %681 = vmatpush.bf16.msra.mxu0 %v639
        %682 = vmatpush.bf16.msra.mxu0 %v637
        %683 = vmatpush.bf16.msra.mxu0 %v635
        %684 = vmatpush.bf16.msra.mxu0 %v633
        %685 = vmatmul.bf16.gmra.mxu0 %v561
        %v686 = vpop.f32.mrf.mxu0
        %v687 = vadd.f32 %v581, %v686
        %v688 = vpop.f32.mrf.mxu0
        %689 = vdwg.mxu0
        %s690 = sld [smem:[#allocation9]]
        %v691 = vstv %s690
        %v692 = vmul.f32 %v674, %v691
        %v693 = vmul.f32 %v687, %v691
        %s694 = sld [smem:[#allocation10]]
        %v695 = vstv %s694
        %v696 = vadd.f32 %v692, %v695
        %v697 = vadd.f32 %v693, %v695
        %vm698 = vcmp.ge.f32.partialorder %v696, 0.0
        %vm699 = vcmp.ge.f32.partialorder %v697, 0.0
        %v700 = vmul.f32 %v696, 0.01
        %v701 = vmul.f32 %v697, 0.01
        %v702 = vsel %vm698, %v696, %v700
        %v703 = vsel %vm699, %v697, %v701
        %v704 = vpack.c.bf16 %v702, %v702
        %v705 = vpack.c.bf16 %v703, %v703
        %v706 = vld [vmem:[#allocation12] sm:$0xf]
        %v707 = vld [vmem:[#allocation12 + $0x4] sm:$0xf]
        %v708 = vld [vmem:[#allocation12 + $0x8] sm:$0xf]
        %v709 = vld [vmem:[#allocation12 + $0xc] sm:$0xf]
        %v710 = vld [vmem:[#allocation12 + $0x10] sm:$0xf]
        %v711 = vld [vmem:[#allocation12 + $0x14] sm:$0xf]
        %v712 = vld [vmem:[#allocation12 + $0x18] sm:$0xf]
        %v713 = vld [vmem:[#allocation12 + $0x1c] sm:$0xf]
        %v714 = vld [vmem:[#allocation12 + $0x20] sm:$0xf]
        %v715 = vld [vmem:[#allocation12 + $0x24] sm:$0xf]
        %v716 = vld [vmem:[#allocation12 + $0x28] sm:$0xf]
        %v717 = vld [vmem:[#allocation12 + $0x2c] sm:$0xf]
        %v718 = vld [vmem:[#allocation12 + $0x30] sm:$0xf]
        %v719 = vld [vmem:[#allocation12 + $0x34] sm:$0xf]
        %v720 = vld [vmem:[#allocation12 + $0x38] sm:$0xf]
        %v721 = vld [vmem:[#allocation12 + $0x3c] sm:$0xf]
        %v722 = vld [vmem:[#allocation12 + $0x40] sm:$0xf]
        %v723 = vld [vmem:[#allocation12 + $0x44] sm:$0xf]
        %v724 = vld [vmem:[#allocation12 + $0x48] sm:$0xf]
        %v725 = vld [vmem:[#allocation12 + $0x4c] sm:$0xf]
        %v726 = vld [vmem:[#allocation12 + $0x50] sm:$0xf]
        %v727 = vld [vmem:[#allocation12 + $0x54] sm:$0xf]
        %v728 = vld [vmem:[#allocation12 + $0x58] sm:$0xf]
        %v729 = vld [vmem:[#allocation12 + $0x5c] sm:$0xf]
        %v730 = vld [vmem:[#allocation12 + $0x60] sm:$0xf]
        %v731 = vld [vmem:[#allocation12 + $0x64] sm:$0xf]
        %v732 = vld [vmem:[#allocation12 + $0x68] sm:$0xf]
        %v733 = vld [vmem:[#allocation12 + $0x6c] sm:$0xf]
        %v734 = vld [vmem:[#allocation12 + $0x70] sm:$0xf]
        %v735 = vld [vmem:[#allocation12 + $0x74] sm:$0xf]
        %v736 = vld [vmem:[#allocation12 + $0x78] sm:$0xf]
        %v737 = vld [vmem:[#allocation12 + $0x7c] sm:$0xf]
        %v738 = vld [vmem:[%s6] sm:$0x1]
        %v740 = vperm.slane %v738, 0
        %v774 = vunpack.c.l.b16 %v706
        %v775 = vunpack.c.l.b16 %v707
        %v776 = vunpack.c.l.b16 %v708
        %v777 = vunpack.c.l.b16 %v709
        %v778 = vunpack.c.l.b16 %v710
        %v779 = vunpack.c.l.b16 %v711
        %v780 = vunpack.c.l.b16 %v712
        %v781 = vunpack.c.l.b16 %v713
        %v782 = vunpack.c.l.b16 %v714
        %v783 = vunpack.c.l.b16 %v715
        %v784 = vunpack.c.l.b16 %v716
        %v785 = vunpack.c.l.b16 %v717
        %v786 = vunpack.c.l.b16 %v718
        %v787 = vunpack.c.l.b16 %v719
        %v788 = vunpack.c.l.b16 %v720
        %v789 = vunpack.c.l.b16 %v721
        %v790 = vunpack.c.l.b16 %v722
        %v791 = vunpack.c.l.b16 %v723
        %v792 = vunpack.c.l.b16 %v724
        %v793 = vunpack.c.l.b16 %v725
        %v794 = vunpack.c.l.b16 %v726
        %v795 = vunpack.c.l.b16 %v727
        %v796 = vunpack.c.l.b16 %v728
        %v797 = vunpack.c.l.b16 %v729
        %v798 = vunpack.c.l.b16 %v730
        %v799 = vunpack.c.l.b16 %v731
        %v800 = vunpack.c.l.b16 %v732
        %v801 = vunpack.c.l.b16 %v733
        %v802 = vunpack.c.l.b16 %v734
        %v803 = vunpack.c.l.b16 %v735
        %v804 = vunpack.c.l.b16 %v736
        %v805 = vunpack.c.l.b16 %v737
        %v806 = vpack.c.b16 %v775, %v774
        %v807 = vpack.c.b16 %v777, %v776
        %v808 = vpack.c.b16 %v779, %v778
        %v809 = vpack.c.b16 %v781, %v780
        %v810 = vpack.c.b16 %v783, %v782
        %v811 = vpack.c.b16 %v785, %v784
        %v812 = vpack.c.b16 %v787, %v786
        %v813 = vpack.c.b16 %v789, %v788
        %v814 = vpack.c.b16 %v791, %v790
        %v815 = vpack.c.b16 %v793, %v792
        %v816 = vpack.c.b16 %v795, %v794
        %v817 = vpack.c.b16 %v797, %v796
        %v818 = vpack.c.b16 %v799, %v798
        %v819 = vpack.c.b16 %v801, %v800
        %v820 = vpack.c.b16 %v803, %v802
        %v821 = vpack.c.b16 %v805, %v804
        %838 = vmatpush.bf16.msra.mxu0 %v813
        %839 = vmatpush.bf16.msra.mxu0 %v812
        %840 = vmatpush.bf16.msra.mxu0 %v811
        %841 = vmatpush.bf16.msra.mxu0 %v810
        %842 = vmatpush.bf16.msra.mxu0 %v809
        %843 = vmatpush.bf16.msra.mxu0 %v808
        %844 = vmatpush.bf16.msra.mxu0 %v807
        %845 = vmatpush.bf16.msra.mxu0 %v806
        %846 = vmatmul.bf16.gmra.mxu0 %v704
        %v847 = vpop.f32.mrf.mxu0
        %v848 = vadd.f32 %v740, %v847
        %v849 = vpop.f32.mrf.mxu0
        %850 = vdwg.mxu0
        %851 = vmatpush.bf16.msra.mxu0 %v821
        %852 = vmatpush.bf16.msra.mxu0 %v820
        %853 = vmatpush.bf16.msra.mxu0 %v819
        %854 = vmatpush.bf16.msra.mxu0 %v818
        %855 = vmatpush.bf16.msra.mxu0 %v817
        %856 = vmatpush.bf16.msra.mxu0 %v816
        %857 = vmatpush.bf16.msra.mxu0 %v815
        %858 = vmatpush.bf16.msra.mxu0 %v814
        %859 = vmatmul.bf16.gmra.mxu0 %v705
        %v860 = vpop.f32.mrf.mxu0
        %v861 = vadd.f32 %v848, %v860
        %v862 = vpop.f32.mrf.mxu0
        %863 = vdwg.mxu0
        %s864 = sld [smem:[#allocation14]]
        %v865 = vstv %s864
        %v866 = vmul.f32 %v861, %v865
        %s867 = sld [smem:[#allocation15]]
        %v868 = vstv %s867
        %v869 = vadd.f32 %v866, %v868
        %vm870 = vcmp.ge.f32.partialorder %v869, 0.0
        %v871 = vmul.f32 %v869, 0.01
        %v872 = vsel %vm870, %v869, %v871
        %s873 = sld [smem:[#allocation17]]
        %v874 = vstv %s873
        %v875 = vmul.f32 %v872, %v874
        %s876 = scalar_lea.vmem %s473, 4 [#allocation2]
        %v877 = vld [vmem:[%s876] sm:$0xf]
        %878 = vmatpush.bf16.msra.mxu0 %v646
        %879 = vmatpush.bf16.msra.mxu0 %v644
        %880 = vmatpush.bf16.msra.mxu0 %v642
        %881 = vmatpush.bf16.msra.mxu0 %v640
        %882 = vmatpush.bf16.msra.mxu0 %v638
        %883 = vmatpush.bf16.msra.mxu0 %v636
        %884 = vmatpush.bf16.msra.mxu0 %v634
        %885 = vmatpush.bf16.msra.mxu0 %v632
        %886 = vmatmul.bf16.gmra.mxu0 %v877
        %v887 = vpop.f32.mrf.mxu0
        %v888 = vadd.f32 %v580, %v887
        %v889 = vpop.f32.mrf.mxu0
        %890 = vdwg.mxu0
        %891 = vmatpush.bf16.msra.mxu0 %v647
        %892 = vmatpush.bf16.msra.mxu0 %v645
        %893 = vmatpush.bf16.msra.mxu0 %v643
        %894 = vmatpush.bf16.msra.mxu0 %v641
        %895 = vmatpush.bf16.msra.mxu0 %v639
        %896 = vmatpush.bf16.msra.mxu0 %v637
        %897 = vmatpush.bf16.msra.mxu0 %v635
        %898 = vmatpush.bf16.msra.mxu0 %v633
        %899 = vmatmul.bf16.gmra.mxu0 %v877
        %v900 = vpop.f32.mrf.mxu0
        %v901 = vadd.f32 %v581, %v900
        %v902 = vpop.f32.mrf.mxu0
        %903 = vdwg.mxu0
        %s904 = sld [smem:[#allocation9 + $0x1]]
        %v905 = vstv %s904
        %v906 = vmul.f32 %v888, %v905
        %v907 = vmul.f32 %v901, %v905
        %s908 = sld [smem:[#allocation10 + $0x1]]
        %v909 = vstv %s908
        %v910 = vadd.f32 %v906, %v909
        %v911 = vadd.f32 %v907, %v909
        %vm912 = vcmp.ge.f32.partialorder %v910, 0.0
        %vm913 = vcmp.ge.f32.partialorder %v911, 0.0
        %v914 = vmul.f32 %v910, 0.01
        %v915 = vmul.f32 %v911, 0.01
        %v916 = vsel %vm912, %v910, %v914
        %v917 = vsel %vm913, %v911, %v915
        %v918 = vpack.c.bf16 %v916, %v916
        %v919 = vpack.c.bf16 %v917, %v917
        %920 = vmatpush.bf16.msra.mxu0 %v813
        %921 = vmatpush.bf16.msra.mxu0 %v812
        %922 = vmatpush.bf16.msra.mxu0 %v811
        %923 = vmatpush.bf16.msra.mxu0 %v810
        %924 = vmatpush.bf16.msra.mxu0 %v809
        %925 = vmatpush.bf16.msra.mxu0 %v808
        %926 = vmatpush.bf16.msra.mxu0 %v807
        %927 = vmatpush.bf16.msra.mxu0 %v806
        %928 = vmatmul.bf16.gmra.mxu0 %v918
        %v929 = vpop.f32.mrf.mxu0
        %v930 = vadd.f32 %v740, %v929
        %v931 = vpop.f32.mrf.mxu0
        %932 = vdwg.mxu0
        %933 = vmatpush.bf16.msra.mxu0 %v821
        %934 = vmatpush.bf16.msra.mxu0 %v820
        %935 = vmatpush.bf16.msra.mxu0 %v819
        %936 = vmatpush.bf16.msra.mxu0 %v818
        %937 = vmatpush.bf16.msra.mxu0 %v817
        %938 = vmatpush.bf16.msra.mxu0 %v816
        %939 = vmatpush.bf16.msra.mxu0 %v815
        %940 = vmatpush.bf16.msra.mxu0 %v814
        %941 = vmatmul.bf16.gmra.mxu0 %v919
        %v942 = vpop.f32.mrf.mxu0
        %v943 = vadd.f32 %v930, %v942
        %v944 = vpop.f32.mrf.mxu0
        %945 = vdwg.mxu0
        %s946 = sld [smem:[#allocation14 + $0x1]]
        %v947 = vstv %s946
        %v948 = vmul.f32 %v943, %v947
        %s949 = sld [smem:[#allocation15 + $0x1]]
        %v950 = vstv %s949
        %v951 = vadd.f32 %v948, %v950
        %vm952 = vcmp.ge.f32.partialorder %v951, 0.0
        %v953 = vmul.f32 %v951, 0.01
        %v954 = vsel %vm952, %v951, %v953
        %s955 = sld [smem:[#allocation17 + $0x1]]
        %v956 = vstv %s955
        %v957 = vmul.f32 %v954, %v956
        %v958 = vadd.f32 %v875, %v957
        %s959 = scalar_lea.vmem %s473, 8 [#allocation2]
        %v960 = vld [vmem:[%s959] sm:$0xf]
        %961 = vmatpush.bf16.msra.mxu0 %v646
        %962 = vmatpush.bf16.msra.mxu0 %v644
        %963 = vmatpush.bf16.msra.mxu0 %v642
        %964 = vmatpush.bf16.msra.mxu0 %v640
        %965 = vmatpush.bf16.msra.mxu0 %v638
        %966 = vmatpush.bf16.msra.mxu0 %v636
        %967 = vmatpush.bf16.msra.mxu0 %v634
        %968 = vmatpush.bf16.msra.mxu0 %v632
        %969 = vmatmul.bf16.gmra.mxu0 %v960
        %v970 = vpop.f32.mrf.mxu0
        %v971 = vadd.f32 %v580, %v970
        %v972 = vpop.f32.mrf.mxu0
        %973 = vdwg.mxu0
        %974 = vmatpush.bf16.msra.mxu0 %v647
        %975 = vmatpush.bf16.msra.mxu0 %v645
        %976 = vmatpush.bf16.msra.mxu0 %v643
        %977 = vmatpush.bf16.msra.mxu0 %v641
        %978 = vmatpush.bf16.msra.mxu0 %v639
        %979 = vmatpush.bf16.msra.mxu0 %v637
        %980 = vmatpush.bf16.msra.mxu0 %v635
        %981 = vmatpush.bf16.msra.mxu0 %v633
        %982 = vmatmul.bf16.gmra.mxu0 %v960
        %v983 = vpop.f32.mrf.mxu0
        %v984 = vadd.f32 %v581, %v983
        %v985 = vpop.f32.mrf.mxu0
        %986 = vdwg.mxu0
        %s987 = sld [smem:[#allocation9 + $0x2]]
        %v988 = vstv %s987
        %v989 = vmul.f32 %v971, %v988
        %v990 = vmul.f32 %v984, %v988
        %s991 = sld [smem:[#allocation10 + $0x2]]
        %v992 = vstv %s991
        %v993 = vadd.f32 %v989, %v992
        %v994 = vadd.f32 %v990, %v992
        %vm995 = vcmp.ge.f32.partialorder %v993, 0.0
        %vm996 = vcmp.ge.f32.partialorder %v994, 0.0
        %v997 = vmul.f32 %v993, 0.01
        %v998 = vmul.f32 %v994, 0.01
        %v999 = vsel %vm995, %v993, %v997
        %v1000 = vsel %vm996, %v994, %v998
        %v1001 = vpack.c.bf16 %v999, %v999
        %v1002 = vpack.c.bf16 %v1000, %v1000
        %1003 = vmatpush.bf16.msra.mxu0 %v813
        %1004 = vmatpush.bf16.msra.mxu0 %v812
        %1005 = vmatpush.bf16.msra.mxu0 %v811
        %1006 = vmatpush.bf16.msra.mxu0 %v810
        %1007 = vmatpush.bf16.msra.mxu0 %v809
        %1008 = vmatpush.bf16.msra.mxu0 %v808
        %1009 = vmatpush.bf16.msra.mxu0 %v807
        %1010 = vmatpush.bf16.msra.mxu0 %v806
        %1011 = vmatmul.bf16.gmra.mxu0 %v1001
        %v1012 = vpop.f32.mrf.mxu0
        %v1013 = vadd.f32 %v740, %v1012
        %v1014 = vpop.f32.mrf.mxu0
        %1015 = vdwg.mxu0
        %1016 = vmatpush.bf16.msra.mxu0 %v821
        %1017 = vmatpush.bf16.msra.mxu0 %v820
        %1018 = vmatpush.bf16.msra.mxu0 %v819
        %1019 = vmatpush.bf16.msra.mxu0 %v818
        %1020 = vmatpush.bf16.msra.mxu0 %v817
        %1021 = vmatpush.bf16.msra.mxu0 %v816
        %1022 = vmatpush.bf16.msra.mxu0 %v815
        %1023 = vmatpush.bf16.msra.mxu0 %v814
        %1024 = vmatmul.bf16.gmra.mxu0 %v1002
        %v1025 = vpop.f32.mrf.mxu0
        %v1026 = vadd.f32 %v1013, %v1025
        %v1027 = vpop.f32.mrf.mxu0
        %1028 = vdwg.mxu0
        %s1029 = sld [smem:[#allocation14 + $0x2]]
        %v1030 = vstv %s1029
        %v1031 = vmul.f32 %v1026, %v1030
        %s1032 = sld [smem:[#allocation15 + $0x2]]
        %v1033 = vstv %s1032
        %v1034 = vadd.f32 %v1031, %v1033
        %vm1035 = vcmp.ge.f32.partialorder %v1034, 0.0
        %v1036 = vmul.f32 %v1034, 0.01
        %v1037 = vsel %vm1035, %v1034, %v1036
        %s1038 = sld [smem:[#allocation17 + $0x2]]
        %v1039 = vstv %s1038
        %v1040 = vmul.f32 %v1037, %v1039
        %v1041 = vadd.f32 %v958, %v1040
        %s1042 = scalar_lea.vmem %s473, 12 [#allocation2]
        %v1043 = vld [vmem:[%s1042] sm:$0xf]
        %1044 = vmatpush.bf16.msra.mxu0 %v646
        %1045 = vmatpush.bf16.msra.mxu0 %v644
        %1046 = vmatpush.bf16.msra.mxu0 %v642
        %1047 = vmatpush.bf16.msra.mxu0 %v640
        %1048 = vmatpush.bf16.msra.mxu0 %v638
        %1049 = vmatpush.bf16.msra.mxu0 %v636
        %1050 = vmatpush.bf16.msra.mxu0 %v634
        %1051 = vmatpush.bf16.msra.mxu0 %v632
        %1052 = vmatmul.bf16.gmra.mxu0 %v1043
        %v1053 = vpop.f32.mrf.mxu0
        %v1054 = vadd.f32 %v580, %v1053
        %v1055 = vpop.f32.mrf.mxu0
        %1056 = vdwg.mxu0
        %1057 = vmatpush.bf16.msra.mxu0 %v647
        %1058 = vmatpush.bf16.msra.mxu0 %v645
        %1059 = vmatpush.bf16.msra.mxu0 %v643
        %1060 = vmatpush.bf16.msra.mxu0 %v641
        %1061 = vmatpush.bf16.msra.mxu0 %v639
        %1062 = vmatpush.bf16.msra.mxu0 %v637
        %1063 = vmatpush.bf16.msra.mxu0 %v635
        %1064 = vmatpush.bf16.msra.mxu0 %v633
        %1065 = vmatmul.bf16.gmra.mxu0 %v1043
        %v1066 = vpop.f32.mrf.mxu0
        %v1067 = vadd.f32 %v581, %v1066
        %v1068 = vpop.f32.mrf.mxu0
        %1069 = vdwg.mxu0
        %s1070 = sld [smem:[#allocation9 + $0x3]]
        %v1071 = vstv %s1070
        %v1072 = vmul.f32 %v1054, %v1071
        %v1073 = vmul.f32 %v1067, %v1071
        %s1074 = sld [smem:[#allocation10 + $0x3]]
        %v1075 = vstv %s1074
        %v1076 = vadd.f32 %v1072, %v1075
        %v1077 = vadd.f32 %v1073, %v1075
        %vm1078 = vcmp.ge.f32.partialorder %v1076, 0.0
        %vm1079 = vcmp.ge.f32.partialorder %v1077, 0.0
        %v1080 = vmul.f32 %v1076, 0.01
        %v1081 = vmul.f32 %v1077, 0.01
        %v1082 = vsel %vm1078, %v1076, %v1080
        %v1083 = vsel %vm1079, %v1077, %v1081
        %v1084 = vpack.c.bf16 %v1082, %v1082
        %v1085 = vpack.c.bf16 %v1083, %v1083
        %1086 = vmatpush.bf16.msra.mxu0 %v813
        %1087 = vmatpush.bf16.msra.mxu0 %v812
        %1088 = vmatpush.bf16.msra.mxu0 %v811
        %1089 = vmatpush.bf16.msra.mxu0 %v810
        %1090 = vmatpush.bf16.msra.mxu0 %v809
        %1091 = vmatpush.bf16.msra.mxu0 %v808
        %1092 = vmatpush.bf16.msra.mxu0 %v807
        %1093 = vmatpush.bf16.msra.mxu0 %v806
        %1094 = vmatmul.bf16.gmra.mxu0 %v1084
        %v1095 = vpop.f32.mrf.mxu0
        %v1096 = vadd.f32 %v740, %v1095
        %v1097 = vpop.f32.mrf.mxu0
        %1098 = vdwg.mxu0
        %1099 = vmatpush.bf16.msra.mxu0 %v821
        %1100 = vmatpush.bf16.msra.mxu0 %v820
        %1101 = vmatpush.bf16.msra.mxu0 %v819
        %1102 = vmatpush.bf16.msra.mxu0 %v818
        %1103 = vmatpush.bf16.msra.mxu0 %v817
        %1104 = vmatpush.bf16.msra.mxu0 %v816
        %1105 = vmatpush.bf16.msra.mxu0 %v815
        %1106 = vmatpush.bf16.msra.mxu0 %v814
        %1107 = vmatmul.bf16.gmra.mxu0 %v1085
        %v1108 = vpop.f32.mrf.mxu0
        %v1109 = vadd.f32 %v1096, %v1108
        %v1110 = vpop.f32.mrf.mxu0
        %1111 = vdwg.mxu0
        %s1112 = sld [smem:[#allocation14 + $0x3]]
        %v1113 = vstv %s1112
        %v1114 = vmul.f32 %v1109, %v1113
        %s1115 = sld [smem:[#allocation15 + $0x3]]
        %v1116 = vstv %s1115
        %v1117 = vadd.f32 %v1114, %v1116
        %vm1118 = vcmp.ge.f32.partialorder %v1117, 0.0
        %v1119 = vmul.f32 %v1117, 0.01
        %v1120 = vsel %vm1118, %v1117, %v1119
        %s1121 = sld [smem:[#allocation17 + $0x3]]
        %v1122 = vstv %s1121
        %v1123 = vmul.f32 %v1120, %v1122
        %v1124 = vadd.f32 %v1041, %v1123
        %v1125 = vpack.c.bf16 %v1124, %v1124
        %v1126 = vld [vmem:[#allocation18] sm:$0xf]
        %v1127 = vld [vmem:[#allocation18 + $0x4] sm:$0xf]
        %v1128 = vld [vmem:[#allocation18 + $0x8] sm:$0xf]
        %v1129 = vld [vmem:[#allocation18 + $0xc] sm:$0xf]
        %v1130 = vld [vmem:[#allocation18 + $0x10] sm:$0xf]
        %v1131 = vld [vmem:[#allocation18 + $0x14] sm:$0xf]
        %v1132 = vld [vmem:[#allocation18 + $0x18] sm:$0xf]
        %v1133 = vld [vmem:[#allocation18 + $0x1c] sm:$0xf]
        %v1134 = vld [vmem:[#allocation18 + $0x20] sm:$0xf]
        %v1135 = vld [vmem:[#allocation18 + $0x24] sm:$0xf]
        %v1136 = vld [vmem:[#allocation18 + $0x28] sm:$0xf]
        %v1137 = vld [vmem:[#allocation18 + $0x2c] sm:$0xf]
        %v1138 = vld [vmem:[#allocation18 + $0x30] sm:$0xf]
        %v1139 = vld [vmem:[#allocation18 + $0x34] sm:$0xf]
        %v1140 = vld [vmem:[#allocation18 + $0x38] sm:$0xf]
        %v1141 = vld [vmem:[#allocation18 + $0x3c] sm:$0xf]
        %v1142 = vld [vmem:[%s11] sm:$0x1]
        %v1144 = vperm.slane %v1142, 0
        %v1162 = vunpack.c.l.b16 %v1126
        %v1163 = vunpack.c.l.b16 %v1127
        %v1164 = vunpack.c.l.b16 %v1128
        %v1165 = vunpack.c.l.b16 %v1129
        %v1166 = vunpack.c.l.b16 %v1130
        %v1167 = vunpack.c.l.b16 %v1131
        %v1168 = vunpack.c.l.b16 %v1132
        %v1169 = vunpack.c.l.b16 %v1133
        %v1170 = vunpack.c.l.b16 %v1134
        %v1171 = vunpack.c.l.b16 %v1135
        %v1172 = vunpack.c.l.b16 %v1136
        %v1173 = vunpack.c.l.b16 %v1137
        %v1174 = vunpack.c.l.b16 %v1138
        %v1175 = vunpack.c.l.b16 %v1139
        %v1176 = vunpack.c.l.b16 %v1140
        %v1177 = vunpack.c.l.b16 %v1141
        %v1178 = vpack.c.b16 %v1163, %v1162
        %v1179 = vpack.c.b16 %v1165, %v1164
        %v1180 = vpack.c.b16 %v1167, %v1166
        %v1181 = vpack.c.b16 %v1169, %v1168
        %v1182 = vpack.c.b16 %v1171, %v1170
        %v1183 = vpack.c.b16 %v1173, %v1172
        %v1184 = vpack.c.b16 %v1175, %v1174
        %v1185 = vpack.c.b16 %v1177, %v1176
        %1194 = vmatpush.bf16.msra.mxu0 %v1185
        %1195 = vmatpush.bf16.msra.mxu0 %v1184
        %1196 = vmatpush.bf16.msra.mxu0 %v1183
        %1197 = vmatpush.bf16.msra.mxu0 %v1182
        %1198 = vmatpush.bf16.msra.mxu0 %v1181
        %1199 = vmatpush.bf16.msra.mxu0 %v1180
        %1200 = vmatpush.bf16.msra.mxu0 %v1179
        %1201 = vmatpush.bf16.msra.mxu0 %v1178
        %1202 = vmatmul.bf16.gmra.mxu0 %v1125
        %v1203 = vpop.f32.mrf.mxu0
        %v1204 = vadd.f32 %v1144, %v1203
        %v1205 = vpop.f32.mrf.mxu0
        %1206 = vdwg.mxu0
        %1207 = vst [vmem:[%s560] sm:$0xff] %v1204
        %s1208 = sand.u32 %s299, 1
        %s1209 = scalar_lea.sflag [#allocation4], %s1208
        %s1210 = sand.u32 %s299, 1
        %s1211 = smul.addr %s1210, 8
        %s1212 = scalar_lea.vmem [#allocation19], %s1211
        // Predicated region
        $region109: #{tpu_custom_call.1} parent=67 // pred_check
          %p1213 = pneg %p309
        $region110: #{tpu_custom_call.1} parent=67 // pred_check_branch
          %1215 = sbr.rel (%p1213) target = $region112
        $region111: #{tpu_custom_call.1} parent=67 // pred_region
          %1217 = vsyncadd %s1209, 0
          %s1218 = smul.addr %s34, 8
          %s1219 = scalar_lea.hbm %s12, %s1218
          %s1221 = sshll.u32 %s1212, 4
          %s1222 = int_to_ptr.vmem [resolvable:$true] %s1221
          %s1223 = sshll.u32 %s1219, 4
          %s1224 = int_to_ptr.hbm [resolvable:$true] %s1223
          %1226 = dma.vmem_to_hbm [thread:$0]  %s1222, 128, %s1224, %s1209
        $region112: #{tpu_custom_call.1} parent=67 // pred_fallthru
          _
      $region68: #{tpu_custom_call.1} parent=5 // pred_fallthru
        _
      %p1227 = scmp.le.s32.totalorder 2, %s29
      // Predicated region
      $region113: #{tpu_custom_call.1} parent=5 // pred_check
        %p1228 = pneg %p1227
      $region114: #{tpu_custom_call.1} parent=5 // pred_check_branch
        %1230 = sbr.rel (%p1228) target = $region116
      $region115: #{tpu_custom_call.1} parent=5 // pred_region
        %s1231 = ssub.s32 %s29, 2
        // Predicated region
        $region117: #{tpu_custom_call.1} parent=115 // pred_check
          %p1232 = pneg %p315
        $region118: #{tpu_custom_call.1} parent=115 // pred_check_branch
          %1234 = sbr.rel (%p1232) target = $region120
        $region119: #{tpu_custom_call.1} parent=115 // pred_region
          %s1235 = sand.u32 %s300, 1
          %s1236 = scalar_lea.sflag [#allocation4], %s1235
          %s1237 = sand.u32 %s300, 1
          %s1238 = smul.addr %s1237, 8
          %s1239 = scalar_lea.vmem [#allocation19], %s1238
          %1241 = dma.done %s1236, 128
        $region120: #{tpu_custom_call.1} parent=115 // pred_fallthru
          _
      $region116: #{tpu_custom_call.1} parent=5 // pred_fallthru
        _
    $region6: #{tpu_custom_call.1} parent=1 // loop_footer
      %s33 = sadd.s32 1, %s29
    $region7: #{tpu_custom_call.1} parent=1 // loop_footer_branch
      %28 = sbr.rel target = $region3
    $region8: #{tpu_custom_call.1} parent=1 // loop_exit
      _
    %1242 = vsyncpa [#allocation3], 1
    %s1243 = scalar_lea.sflag [#allocation3], 1
    %1244 = vsyncpa %s1243, 1
    %1245 = vsyncpa [#allocation7], 1
    %1246 = vsyncpa [#allocation13], 1
    %1247 = vsyncpa [#allocation4], 1
    %s1248 = scalar_lea.sflag [#allocation4], 1
    %1249 = vsyncpa %s1248, 1
    %1250 = vsyncpa [#allocation5], 1
    %s1251 = scalar_lea.sflag [#allocation5], 1
    %1252 = vsyncpa %s1251, 1
    %1253 = vsyncpa [#allocation11], 1
    %1254 = vsyncpa [#allocation16], 1

</llo_original>
